<compile_context>
chip_gen: v5e
topology: v5e:2x2
jax: 0.10.0
libtpu: 0.0.40
codegen_flags: <defaults>
</compile_context>

<pallas_src>
import functools

import numpy as np
import jax
import jax.numpy as jnp
from jax.experimental import pallas as pl
from jax.experimental.pallas import tpu as pltpu


def _round_up(x, m):
    return (x + m - 1) // m * m


# --------------------------------------------------------------------------
# Fused kernel: all SAGEConv layers + pair head, everything VMEM-resident.
# --------------------------------------------------------------------------
def _fused_sage_kernel(*refs, num_layers, num_graphs):
    (c_ref, a_ref, invd_ref, x_ref) = refs[:4]
    layer_refs = refs[4:4 + 3 * num_layers]          # [wl_0, wr_0, b_0, wl_1, ...]
    (w1_ref, b1_ref, w2_ref, b2_ref, o_ref, h_ref) = refs[4 + 3 * num_layers:]

    a01 = a_ref[...]        # (Np, Np) bf16 0/1 (edge-count) adjacency -- exact
    invd = invd_ref[...]    # (Np, 1)  f32 1/deg (0 for isolated / padded rows)
    x = x_ref[...]          # (Np, Hp) bf16 layer-0 activations

    for l in range(num_layers):
        wl = layer_refs[3 * l][...]                  # (Hp, Hp) bf16
        wr = layer_refs[3 * l + 1][...]              # (Hp, Hp) bf16
        b = layer_refs[3 * l + 2][...]               # (1, Hp)  f32
        xb = x.astype(jnp.bfloat16)                  # single cast, reused twice
        # Mean aggregation: exact 0/1 bf16 adjacency, f32 accumulation, f32 scale.
        agg = jnp.dot(a01, xb, preferred_element_type=jnp.float32) * invd
        # Two K=Hp MXU passes summed in f32 (no concat temp, no zero-padded K).
        out = (jnp.dot(agg.astype(jnp.bfloat16), wl,
                       preferred_element_type=jnp.float32)
               + jnp.dot(xb, wr, preferred_element_type=jnp.float32)
               + b)
        # ReLU on all but the last conv; dropout is identity in eval mode.
        x = jnp.maximum(out, 0.0) if l < num_layers - 1 else out

    # ---- pair head: exact center-row gather, X never leaves VMEM ----
    # Padded rows N..Np are NEVER selected: every center index (and +1) points at
    # a real node row, and A's padded columns are zero, so the bias/ReLU values
    # accumulated in padded rows are never read.
    h_ref[...] = jnp.zeros_like(h_ref)
    row_id = jax.lax.broadcasted_iota(jnp.int32, (x.shape[0], 1), 0)   # (Np, 1)
    for g in range(num_graphs):                      # G is small & static
        ci = c_ref[g]                                # SMEM scalar read
        m_src = (row_id == ci).astype(jnp.float32)
        m_dst = (row_id == ci + 1).astype(jnp.float32)
        xs = jnp.sum(x * m_src, axis=0, keepdims=True)   # (1, Hp) == x[ci]   (exact)
        xd = jnp.sum(x * m_dst, axis=0, keepdims=True)   # (1, Hp) == x[ci+1] (exact)
        h_ref[pl.ds(g, 1), :] = xs * xd
    # TODO(synk): for large G switch this gather to a tiled selector matmul or
    # dynamic-slice loads; the mask-reduce loop is O(G*N*H) VPU work.

    h = h_ref[...]                                   # (Gp, Hp) f32
    t = (jnp.dot(h.astype(jnp.bfloat16), w1_ref[...],
                 preferred_element_type=jnp.float32) + b1_ref[...])
    t = jnp.maximum(t, 0.0)                          # f32 epilogue
    # lin2 (H -> 1) as VPU multiply + lane reduction (no MXU pass for one column).
    logit = jnp.sum(t * w2_ref[...], axis=-1, keepdims=True) + b2_ref[0]   # (Gp, 1)
    # Lane-dense store: broadcast across Hp lanes; wrapper slices [:, :1].
    o_ref[...] = jnp.broadcast_to(logit, o_ref.shape).astype(o_ref.dtype)


# --------------------------------------------------------------------------
# Host-side parameter packing (done once): pad to lane-dense shapes, cast the
# MXU operands to bf16, keep biases / lin2 row in f32.
# --------------------------------------------------------------------------
def pack_params(params, hidden):
    H = hidden
    Hp = _round_up(H, 128)
    packed = {"H": H, "Hp": Hp, "num_layers": len(params["convs"])}

    z_emb = params["z_emb"]
    packed["z_emb_pad"] = (jnp.zeros((z_emb.shape[0], Hp), jnp.float32)
                           .at[:, :H].set(z_emb).astype(jnp.bfloat16))

    wls, wrs, biases = [], [], []
    for wl, wr, b in params["convs"]:
        wls.append(jnp.zeros((Hp, Hp), jnp.float32).at[:H, :H].set(wl)
                   .astype(jnp.bfloat16))
        wrs.append(jnp.zeros((Hp, Hp), jnp.float32).at[:H, :H].set(wr)
                   .astype(jnp.bfloat16))
        biases.append(jnp.zeros((1, Hp), jnp.float32).at[:, :H].set(b))
    packed["wls"], packed["wrs"], packed["biases"] = wls, wrs, biases

    packed["w1"] = (jnp.zeros((Hp, Hp), jnp.float32)
                    .at[:H, :H].set(params["w1"]).astype(jnp.bfloat16))
    packed["b1"] = jnp.zeros((1, Hp), jnp.float32).at[:, :H].set(params["b1"])
    packed["w2row"] = jnp.zeros((1, Hp), jnp.float32).at[:, :H].set(params["w2"].T)
    packed["b2"] = params["b2"].reshape((1,)).astype(jnp.float32)   # SMEM scalar
    return packed


# --------------------------------------------------------------------------
# Full SAGE forward.
# --------------------------------------------------------------------------
def sage_forward(packed, z, edge_index, center_indices):
    Hp = packed["Hp"]
    num_layers = packed["num_layers"]

    # ---- XLA glue outside the kernel (embedding lookup, adjacency build) ----
    x = packed["z_emb_pad"][z]                       # (N, Hp) bf16, lane-dense
    N = int(x.shape[0])
    # Np rounded to 128 so the contraction dim of A@X is lane-dense.  For real
    # throughput, batch several SEAL subgraphs block-diagonally so N >= 128/256.
    Np = _round_up(max(N, 1), 128)
    x0 = jnp.zeros((Np, Hp), jnp.bfloat16).at[:N, :].set(x)

    # 0/1 (edge-count) adjacency, exact in bf16; mean normalisation happens
    # inside the kernel as an f32 per-row 1/deg scale.
    # TODO(synk): for N beyond a few thousand nodes replace dense A with an
    # in-kernel sparse segment-mean (scalar-prefetched edge lists + row-tiled
    # grid, dimension_semantics=("parallel","arbitrary") to shard v7x cores).
    src, dst = edge_index[0], edge_index[1]
    adj = jnp.zeros((N, N), jnp.float32).at[dst, src].add(1.0)
    deg = adj.sum(axis=1, keepdims=True)
    inv_deg = jnp.where(deg > 0.0, 1.0 / jnp.where(deg > 0.0, deg, 1.0), 0.0)
    a01 = (jnp.zeros((Np, Np), jnp.float32).at[:N, :N].set(adj)
           .astype(jnp.bfloat16))                    # counts <= 256 are exact in bf16
    invd = jnp.zeros((Np, 1), jnp.float32).at[:N, :].set(inv_deg)

    # Center indices are static per batch layout (mirrors np.unique on `batch`).
    center_np = np.asarray(center_indices, dtype=np.int32)
    G = int(center_np.shape[0])
    assert center_np.min() >= 0 and int(center_np.max()) + 1 < N, \
        "center indices (and +1) must address real node rows"
    Gp = _round_up(G, 8)
    c_smem = jnp.asarray(center_np, jnp.int32)       # (G,) int32 -> SMEM

    vmem = lambda: pl.BlockSpec(memory_space=pltpu.MemorySpace.VMEM)
    smem = lambda: pl.BlockSpec(memory_space=pltpu.MemorySpace.SMEM)

    layer_inputs, layer_specs = [], []
    for wl, wr, b in zip(packed["wls"], packed["wrs"], packed["biases"]):
        layer_inputs += [wl, wr, b]
        layer_specs += [vmem(), vmem(), vmem()]

    # Explicit VMEM budget: everything is resident, so size it from the operands
    # (+ headroom for f32 temps) instead of relying on the per-chip default
    # scoped limit (16 MiB v5e / 32 MiB v6e+v7x).
    resident = (int(a01.size) * 2 + int(x0.size) * 2 + int(invd.size) * 4
                + sum(int(w.size) * 2 for w in packed["wls"])
                + sum(int(w.size) * 2 for w in packed["wrs"])
                + sum(int(b.size) * 4 for b in packed["biases"])
                + int(packed["w1"].size) * 2 + int(packed["b1"].size) * 4
                + int(packed["w2row"].size) * 4
                + Gp * Hp * 4 * 2                    # head scratch + output
                + Np * Hp * 4 * 3)                   # f32 working temps per layer
    vmem_limit = int(min(48 * 1024 * 1024, max(4 * 1024 * 1024, 2 * resident)))

    kernel = functools.partial(_fused_sage_kernel,
                               num_layers=num_layers, num_graphs=G)

    # Single fused call: the whole problem stays VMEM-resident (no per-layer HBM
    # round trips, no per-layer dispatch).  At large N switch to the row-tiled
    # sparse path noted above.
    out_pad = pl.pallas_call(
        kernel,
        out_shape=jax.ShapeDtypeStruct((Gp, Hp), jnp.float32),
        in_specs=[smem(), vmem(), vmem(), vmem()] + layer_specs
                 + [vmem(), vmem(), vmem(), smem()],
        out_specs=vmem(),
        scratch_shapes=[pltpu.VMEM((Gp, Hp), jnp.float32)],
        compiler_params=pltpu.CompilerParams(vmem_limit_bytes=vmem_limit),
    )(c_smem, a01, invd, x0, *layer_inputs,
      packed["w1"], packed["b1"], packed["w2row"], packed["b2"])

    return out_pad[:G, :1]


# --------------------------------------------------------------------------
# Deterministic parameter construction (shapes per SAGE.__init__).
# --------------------------------------------------------------------------
def init_params(key, hidden_channels, num_layers, max_z):
    keys = jax.random.split(key, 4 + 3 * num_layers)
    params = {}
    params["z_emb"] = 0.1 * jax.random.normal(
        keys[0], (max_z, hidden_channels), jnp.float32)

    convs = []
    in_c = hidden_channels
    for l in range(num_layers):
        k_wl, k_wr, k_b = keys[1 + 3 * l: 4 + 3 * l]
        wl = 0.1 * jax.random.normal(k_wl, (in_c, hidden_channels), jnp.float32)
        wr = 0.1 * jax.random.normal(k_wr, (in_c, hidden_channels), jnp.float32)
        b = 0.01 * jax.random.normal(k_b, (1, hidden_channels), jnp.float32)
        convs.append((wl, wr, b))
        in_c = hidden_channels
    params["convs"] = convs

    k_w1, k_w2, k_b2 = keys[-3:]
    params["w1"] = 0.1 * jax.random.normal(
        k_w1, (hidden_channels, hidden_channels), jnp.float32)
    params["b1"] = jnp.zeros((1, hidden_channels), jnp.float32)
    params["w2"] = 0.1 * jax.random.normal(k_w2, (hidden_channels, 1), jnp.float32)
    params["b2"] = 0.01 * jax.random.normal(k_b2, (1, 1), jnp.float32)
    return params


if __name__ == "__main__":
    hidden_channels = 32
    num_layers = 3
    max_z = 10
    num_nodes = 16          # two SEAL subgraphs of 8 nodes each
    num_edges = 40

    key = jax.random.PRNGKey(0)
    k_param, k_z, k_src, k_dst = jax.random.split(key, 4)

    params = init_params(k_param, hidden_channels, num_layers, max_z)
    packed = pack_params(params, hidden_channels)

    # Synthetic inputs.
    z = jax.random.randint(k_z, (num_nodes,), 0, max_z, jnp.int32)
    src = jax.random.randint(k_src, (num_edges,), 0, num_nodes, jnp.int32)
    dst = jax.random.randint(k_dst, (num_edges,), 0, num_nodes, jnp.int32)
    edge_index = jnp.stack([src, dst], axis=0)                 # (2, E)
    batch_np = np.repeat(np.arange(2), num_nodes // 2).astype(np.int64)  # (N,)

    # Center indices are static per batch layout: compute once on host
    # (mirrors np.unique(batch, return_index=True) in the reference).
    center_indices = np.unique(batch_np, return_index=True)[1].astype(np.int32)

    out = sage_forward(packed, z, edge_index, center_indices)
    out = jax.block_until_ready(out)
    assert out.shape == (2, 1) and out.dtype == jnp.float32
    print("KERNEL_OK")
</pallas_src>

<mosaic_0001>
module attributes {stable_mosaic.version = 11 : i64} {
  func.func @_fused_sage_kernel(%arg0: memref<2xi32, #tpu.memory_space<smem>>, %arg1: memref<128x128xbf16, #tpu.memory_space<vmem>>, %arg2: memref<128x1xf32, #tpu.memory_space<vmem>>, %arg3: memref<128x128xbf16, #tpu.memory_space<vmem>>, %arg4: memref<128x128xbf16, #tpu.memory_space<vmem>>, %arg5: memref<128x128xbf16, #tpu.memory_space<vmem>>, %arg6: memref<1x128xf32, #tpu.memory_space<vmem>>, %arg7: memref<128x128xbf16, #tpu.memory_space<vmem>>, %arg8: memref<128x128xbf16, #tpu.memory_space<vmem>>, %arg9: memref<1x128xf32, #tpu.memory_space<vmem>>, %arg10: memref<128x128xbf16, #tpu.memory_space<vmem>>, %arg11: memref<128x128xbf16, #tpu.memory_space<vmem>>, %arg12: memref<1x128xf32, #tpu.memory_space<vmem>>, %arg13: memref<128x128xbf16, #tpu.memory_space<vmem>>, %arg14: memref<1x128xf32, #tpu.memory_space<vmem>>, %arg15: memref<1x128xf32, #tpu.memory_space<vmem>>, %arg16: memref<1xf32, #tpu.memory_space<smem>>, %arg17: memref<8x128xf32, #tpu.memory_space<vmem>>, %arg18: memref<8x128xf32, #tpu.memory_space<vmem>>) attributes {dimension_semantics = [], scalar_prefetch = 0 : i64, scratch_operands = 1 : i64, tpu.core_type = #tpu.core_type<tc>} {
    %c0 = arith.constant 0 : index
    %c0_0 = arith.constant 0 : index
    %0 = vector.load %arg1[%c0, %c0_0] : memref<128x128xbf16, #tpu.memory_space<vmem>>, vector<128x128xbf16>
    %c0_1 = arith.constant 0 : index
    %c0_2 = arith.constant 0 : index
    %1 = vector.load %arg2[%c0_1, %c0_2] : memref<128x1xf32, #tpu.memory_space<vmem>>, vector<128x1xf32>
    %c0_3 = arith.constant 0 : index
    %c0_4 = arith.constant 0 : index
    %2 = vector.load %arg3[%c0_3, %c0_4] : memref<128x128xbf16, #tpu.memory_space<vmem>>, vector<128x128xbf16>
    %c0_5 = arith.constant 0 : index
    %c0_6 = arith.constant 0 : index
    %3 = vector.load %arg4[%c0_5, %c0_6] : memref<128x128xbf16, #tpu.memory_space<vmem>>, vector<128x128xbf16>
    %c0_7 = arith.constant 0 : index
    %c0_8 = arith.constant 0 : index
    %4 = vector.load %arg5[%c0_7, %c0_8] : memref<128x128xbf16, #tpu.memory_space<vmem>>, vector<128x128xbf16>
    %c0_9 = arith.constant 0 : index
    %c0_10 = arith.constant 0 : index
    %5 = vector.load %arg6[%c0_9, %c0_10] : memref<1x128xf32, #tpu.memory_space<vmem>>, vector<1x128xf32>
    %cst = arith.constant dense<0.000000e+00> : vector<128x128xf32>
    %6 = tpu.matmul %0, %2, %cst {dimension_numbers = #tpu.dot_dimension_numbers<[1], [0], [0], [1], [0, 0, 1, 1], [], []>} : vector<128x128xbf16>, vector<128x128xbf16>, vector<128x128xf32> -> vector<128x128xf32>
    %7 = vector.broadcast %1 : vector<128x1xf32> to vector<128x128xf32>
    %8 = arith.mulf %6, %7 : vector<128x128xf32>
    %9 = arith.truncf %8 : vector<128x128xf32> to vector<128x128xbf16>
    %cst_11 = arith.constant dense<0.000000e+00> : vector<128x128xf32>
    %10 = tpu.matmul %9, %3, %cst_11 {dimension_numbers = #tpu.dot_dimension_numbers<[1], [0], [0], [1], [0, 0, 1, 1], [], []>} : vector<128x128xbf16>, vector<128x128xbf16>, vector<128x128xf32> -> vector<128x128xf32>
    %cst_12 = arith.constant dense<0.000000e+00> : vector<128x128xf32>
    %11 = tpu.matmul %2, %4, %cst_12 {dimension_numbers = #tpu.dot_dimension_numbers<[1], [0], [0], [1], [0, 0, 1, 1], [], []>} : vector<128x128xbf16>, vector<128x128xbf16>, vector<128x128xf32> -> vector<128x128xf32>
    %12 = arith.addf %10, %11 : vector<128x128xf32>
    %13 = vector.broadcast %5 : vector<1x128xf32> to vector<128x128xf32>
    %14 = arith.addf %12, %13 : vector<128x128xf32>
    %cst_13 = arith.constant 0.000000e+00 : f32
    %15 = vector.broadcast %cst_13 : f32 to vector<128x128xf32>
    %16 = arith.maximumf %14, %15 : vector<128x128xf32>
    %c0_14 = arith.constant 0 : index
    %c0_15 = arith.constant 0 : index
    %17 = vector.load %arg7[%c0_14, %c0_15] : memref<128x128xbf16, #tpu.memory_space<vmem>>, vector<128x128xbf16>
    %c0_16 = arith.constant 0 : index
    %c0_17 = arith.constant 0 : index
    %18 = vector.load %arg8[%c0_16, %c0_17] : memref<128x128xbf16, #tpu.memory_space<vmem>>, vector<128x128xbf16>
    %c0_18 = arith.constant 0 : index
    %c0_19 = arith.constant 0 : index
    %19 = vector.load %arg9[%c0_18, %c0_19] : memref<1x128xf32, #tpu.memory_space<vmem>>, vector<1x128xf32>
    %20 = arith.truncf %16 : vector<128x128xf32> to vector<128x128xbf16>
    %cst_20 = arith.constant dense<0.000000e+00> : vector<128x128xf32>
    %21 = tpu.matmul %0, %20, %cst_20 {dimension_numbers = #tpu.dot_dimension_numbers<[1], [0], [0], [1], [0, 0, 1, 1], [], []>} : vector<128x128xbf16>, vector<128x128xbf16>, vector<128x128xf32> -> vector<128x128xf32>
    %22 = vector.broadcast %1 : vector<128x1xf32> to vector<128x128xf32>
    %23 = arith.mulf %21, %22 : vector<128x128xf32>
    %24 = arith.truncf %23 : vector<128x128xf32> to vector<128x128xbf16>
    %cst_21 = arith.constant dense<0.000000e+00> : vector<128x128xf32>
    %25 = tpu.matmul %24, %17, %cst_21 {dimension_numbers = #tpu.dot_dimension_numbers<[1], [0], [0], [1], [0, 0, 1, 1], [], []>} : vector<128x128xbf16>, vector<128x128xbf16>, vector<128x128xf32> -> vector<128x128xf32>
    %cst_22 = arith.constant dense<0.000000e+00> : vector<128x128xf32>
    %26 = tpu.matmul %20, %18, %cst_22 {dimension_numbers = #tpu.dot_dimension_numbers<[1], [0], [0], [1], [0, 0, 1, 1], [], []>} : vector<128x128xbf16>, vector<128x128xbf16>, vector<128x128xf32> -> vector<128x128xf32>
    %27 = arith.addf %25, %26 : vector<128x128xf32>
    %28 = vector.broadcast %19 : vector<1x128xf32> to vector<128x128xf32>
    %29 = arith.addf %27, %28 : vector<128x128xf32>
    %cst_23 = arith.constant 0.000000e+00 : f32
    %30 = vector.broadcast %cst_23 : f32 to vector<128x128xf32>
    %31 = arith.maximumf %29, %30 : vector<128x128xf32>
    %c0_24 = arith.constant 0 : index
    %c0_25 = arith.constant 0 : index
    %32 = vector.load %arg10[%c0_24, %c0_25] : memref<128x128xbf16, #tpu.memory_space<vmem>>, vector<128x128xbf16>
    %c0_26 = arith.constant 0 : index
    %c0_27 = arith.constant 0 : index
    %33 = vector.load %arg11[%c0_26, %c0_27] : memref<128x128xbf16, #tpu.memory_space<vmem>>, vector<128x128xbf16>
    %c0_28 = arith.constant 0 : index
    %c0_29 = arith.constant 0 : index
    %34 = vector.load %arg12[%c0_28, %c0_29] : memref<1x128xf32, #tpu.memory_space<vmem>>, vector<1x128xf32>
    %35 = arith.truncf %31 : vector<128x128xf32> to vector<128x128xbf16>
    %cst_30 = arith.constant dense<0.000000e+00> : vector<128x128xf32>
    %36 = tpu.matmul %0, %35, %cst_30 {dimension_numbers = #tpu.dot_dimension_numbers<[1], [0], [0], [1], [0, 0, 1, 1], [], []>} : vector<128x128xbf16>, vector<128x128xbf16>, vector<128x128xf32> -> vector<128x128xf32>
    %37 = vector.broadcast %1 : vector<128x1xf32> to vector<128x128xf32>
    %38 = arith.mulf %36, %37 : vector<128x128xf32>
    %39 = arith.truncf %38 : vector<128x128xf32> to vector<128x128xbf16>
    %cst_31 = arith.constant dense<0.000000e+00> : vector<128x128xf32>
    %40 = tpu.matmul %39, %32, %cst_31 {dimension_numbers = #tpu.dot_dimension_numbers<[1], [0], [0], [1], [0, 0, 1, 1], [], []>} : vector<128x128xbf16>, vector<128x128xbf16>, vector<128x128xf32> -> vector<128x128xf32>
    %cst_32 = arith.constant dense<0.000000e+00> : vector<128x128xf32>
    %41 = tpu.matmul %35, %33, %cst_32 {dimension_numbers = #tpu.dot_dimension_numbers<[1], [0], [0], [1], [0, 0, 1, 1], [], []>} : vector<128x128xbf16>, vector<128x128xbf16>, vector<128x128xf32> -> vector<128x128xf32>
    %42 = arith.addf %40, %41 : vector<128x128xf32>
    %43 = vector.broadcast %34 : vector<1x128xf32> to vector<128x128xf32>
    %44 = arith.addf %42, %43 : vector<128x128xf32>
    %cst_33 = arith.constant 0.000000e+00 : f32
    %45 = vector.broadcast %cst_33 : f32 to vector<8x128xf32>
    %c0_34 = arith.constant 0 : index
    %c0_35 = arith.constant 0 : index
    %46 = vector.load %arg18[%c0_34, %c0_35] : memref<8x128xf32, #tpu.memory_space<vmem>>, vector<8x128xf32>
    tpu.vector_store %arg18[%c0_34, %c0_35], %45 {strides = array<i32>} : memref<8x128xf32, #tpu.memory_space<vmem>>, vector<8x128xf32>,
    %47 = tpu.iota {dimensions = array<i32: 0>} : vector<128x1xi32>
    %c0_36 = arith.constant 0 : index
    %48 = memref.load %arg0[%c0_36] : memref<2xi32, #tpu.memory_space<smem>>
    %49 = vector.broadcast %48 : i32 to vector<128x1xi32>
    %50 = arith.cmpi eq, %47, %49 : vector<128x1xi32>
    %51 = arith.extui %50 : vector<128x1xi1> to vector<128x1xi32>
    %52 = arith.sitofp %51 : vector<128x1xi32> to vector<128x1xf32>
    %c1_i32 = arith.constant 1 : i32
    %53 = arith.addi %48, %c1_i32 : i32
    %54 = vector.broadcast %53 : i32 to vector<128x1xi32>
    %55 = arith.cmpi eq, %47, %54 : vector<128x1xi32>
    %56 = arith.extui %55 : vector<128x1xi1> to vector<128x1xi32>
    %57 = arith.sitofp %56 : vector<128x1xi32> to vector<128x1xf32>
    %58 = vector.broadcast %52 : vector<128x1xf32> to vector<128x128xf32>
    %59 = arith.mulf %44, %58 : vector<128x128xf32>
    %cst_37 = arith.constant dense<0.000000e+00> : vector<128xf32>
    %60 = vector.multi_reduction <add>, %59, %cst_37 [0] : vector<128x128xf32> to vector<128xf32>
    %61 = vector.shape_cast %60 : vector<128xf32> to vector<1x128xf32>
    %62 = vector.broadcast %57 : vector<128x1xf32> to vector<128x128xf32>
    %63 = arith.mulf %44, %62 : vector<128x128xf32>
    %cst_38 = arith.constant dense<0.000000e+00> : vector<128xf32>
    %64 = vector.multi_reduction <add>, %63, %cst_38 [0] : vector<128x128xf32> to vector<128xf32>
    %65 = vector.shape_cast %64 : vector<128xf32> to vector<1x128xf32>
    %66 = arith.mulf %61, %65 : vector<1x128xf32>
    %c0_39 = arith.constant 0 : index
    %c0_40 = arith.constant 0 : index
    %67 = vector.load %arg18[%c0_39, %c0_40] : memref<8x128xf32, #tpu.memory_space<vmem>>, vector<1x128xf32>
    tpu.vector_store %arg18[%c0_39, %c0_40], %66 {strides = array<i32>} : memref<8x128xf32, #tpu.memory_space<vmem>>, vector<1x128xf32>,
    %c1 = arith.constant 1 : index
    %68 = memref.load %arg0[%c1] : memref<2xi32, #tpu.memory_space<smem>>
    %69 = vector.broadcast %68 : i32 to vector<128x1xi32>
    %70 = arith.cmpi eq, %47, %69 : vector<128x1xi32>
    %71 = arith.extui %70 : vector<128x1xi1> to vector<128x1xi32>
    %72 = arith.sitofp %71 : vector<128x1xi32> to vector<128x1xf32>
    %c1_i32_41 = arith.constant 1 : i32
    %73 = arith.addi %68, %c1_i32_41 : i32
    %74 = vector.broadcast %73 : i32 to vector<128x1xi32>
    %75 = arith.cmpi eq, %47, %74 : vector<128x1xi32>
    %76 = arith.extui %75 : vector<128x1xi1> to vector<128x1xi32>
    %77 = arith.sitofp %76 : vector<128x1xi32> to vector<128x1xf32>
    %78 = vector.broadcast %72 : vector<128x1xf32> to vector<128x128xf32>
    %79 = arith.mulf %44, %78 : vector<128x128xf32>
    %cst_42 = arith.constant dense<0.000000e+00> : vector<128xf32>
    %80 = vector.multi_reduction <add>, %79, %cst_42 [0] : vector<128x128xf32> to vector<128xf32>
    %81 = vector.shape_cast %80 : vector<128xf32> to vector<1x128xf32>
    %82 = vector.broadcast %77 : vector<128x1xf32> to vector<128x128xf32>
    %83 = arith.mulf %44, %82 : vector<128x128xf32>
    %cst_43 = arith.constant dense<0.000000e+00> : vector<128xf32>
    %84 = vector.multi_reduction <add>, %83, %cst_43 [0] : vector<128x128xf32> to vector<128xf32>
    %85 = vector.shape_cast %84 : vector<128xf32> to vector<1x128xf32>
    %86 = arith.mulf %81, %85 : vector<1x128xf32>
    %c1_44 = arith.constant 1 : index
    %c0_45 = arith.constant 0 : index
    %87 = vector.load %arg18[%c1_44, %c0_45] : memref<8x128xf32, #tpu.memory_space<vmem>>, vector<1x128xf32>
    tpu.vector_store %arg18[%c1_44, %c0_45], %86 {strides = array<i32>} : memref<8x128xf32, #tpu.memory_space<vmem>>, vector<1x128xf32>,
    %c0_46 = arith.constant 0 : index
    %c0_47 = arith.constant 0 : index
    %88 = vector.load %arg18[%c0_46, %c0_47] : memref<8x128xf32, #tpu.memory_space<vmem>>, vector<8x128xf32>
    %89 = arith.truncf %88 : vector<8x128xf32> to vector<8x128xbf16>
    %c0_48 = arith.constant 0 : index
    %c0_49 = arith.constant 0 : index
    %90 = vector.load %arg13[%c0_48, %c0_49] : memref<128x128xbf16, #tpu.memory_space<vmem>>, vector<128x128xbf16>
    %cst_50 = arith.constant dense<0.000000e+00> : vector<8x128xf32>
    %91 = tpu.matmul %89, %90, %cst_50 {dimension_numbers = #tpu.dot_dimension_numbers<[1], [0], [0], [1], [0, 0, 1, 1], [], []>} : vector<8x128xbf16>, vector<128x128xbf16>, vector<8x128xf32> -> vector<8x128xf32>
    %c0_51 = arith.constant 0 : index
    %c0_52 = arith.constant 0 : index
    %92 = vector.load %arg14[%c0_51, %c0_52] : memref<1x128xf32, #tpu.memory_space<vmem>>, vector<1x128xf32>
    %93 = vector.broadcast %92 : vector<1x128xf32> to vector<8x128xf32>
    %94 = arith.addf %91, %93 : vector<8x128xf32>
    %cst_53 = arith.constant 0.000000e+00 : f32
    %95 = vector.broadcast %cst_53 : f32 to vector<8x128xf32>
    %96 = arith.maximumf %94, %95 : vector<8x128xf32>
    %c0_54 = arith.constant 0 : index
    %c0_55 = arith.constant 0 : index
    %97 = vector.load %arg15[%c0_54, %c0_55] : memref<1x128xf32, #tpu.memory_space<vmem>>, vector<1x128xf32>
    %98 = vector.broadcast %97 : vector<1x128xf32> to vector<8x128xf32>
    %99 = arith.mulf %96, %98 : vector<8x128xf32>
    %cst_56 = arith.constant dense<0.000000e+00> : vector<8xf32>
    %100 = vector.multi_reduction <add>, %99, %cst_56 [1] : vector<8x128xf32> to vector<8xf32>
    %101 = vector.shape_cast %100 : vector<8xf32> to vector<8x1xf32>
    %c0_57 = arith.constant 0 : index
    %102 = memref.load %arg16[%c0_57] : memref<1xf32, #tpu.memory_space<smem>>
    %103 = vector.broadcast %102 : f32 to vector<8x1xf32>
    %104 = arith.addf %101, %103 : vector<8x1xf32>
    %105 = vector.shape_cast %104 : vector<8x1xf32> to vector<8x1xf32>
    %106 = vector.broadcast %105 : vector<8x1xf32> to vector<8x128xf32>
    %c0_58 = arith.constant 0 : index
    %c0_59 = arith.constant 0 : index
    %107 = vector.load %arg17[%c0_58, %c0_59] : memref<8x128xf32, #tpu.memory_space<vmem>>, vector<8x128xf32>
    tpu.vector_store %arg17[%c0_58, %c0_59], %106 {strides = array<i32>} : memref<8x128xf32, #tpu.memory_space<vmem>>, vector<8x128xf32>,
    return
  }
}

</mosaic_0001>

<llo_original>
// kernel: tpu_custom_call.1
$region0: #{tpu_custom_call.1}
  #allocation0 [shape = 'u32[]', space=smem, size = 0x4, offset = 0x4, fixed_abs, tag = 'smem constant byte address 0x4 - core index']
  #allocation1 [shape = 'u32[72,128]{1,0:T(1,128)}', space=vmem, size = 0x9000, scoped, tag = 'internal scratch']
  #allocation2 [shape = 'f32[8,128]{1,0:T(8,128)}', space=vmem, size = 0x1000, scoped, tag = 'scratch operand']
  #allocation3 [shape = 'f32[1]{0:T(128)S(6)}', space=smem, size = 0x200, scoped, tag = 'scoped memory for tpu_custom_call.1']
  %s0 = inlined_call_operand.vmem [shape: s32[2], index: 0, kind: input, shape index: {}]
  %s1 = inlined_call_operand.vmem [shape: bf16[128,128], index: 1, kind: input, shape index: {}]
  %s2 = inlined_call_operand.vmem [shape: f32[128,1], index: 2, kind: input, shape index: {}]
  %s3 = inlined_call_operand.vmem [shape: bf16[128,128], index: 3, kind: input, shape index: {}]
  %s4 = inlined_call_operand.hbm [shape: bf16[128,128], index: 4, kind: input, shape index: {}]
  %s5 = inlined_call_operand.hbm [shape: bf16[128,128], index: 5, kind: input, shape index: {}]
  %s6 = inlined_call_operand.vmem [shape: f32[1,128], index: 6, kind: input, shape index: {}]
  %s7 = inlined_call_operand.hbm [shape: bf16[128,128], index: 7, kind: input, shape index: {}]
  %s8 = inlined_call_operand.hbm [shape: bf16[128,128], index: 8, kind: input, shape index: {}]
  %s9 = inlined_call_operand.vmem [shape: f32[1,128], index: 9, kind: input, shape index: {}]
  %s10 = inlined_call_operand.hbm [shape: bf16[128,128], index: 10, kind: input, shape index: {}]
  %s11 = inlined_call_operand.hbm [shape: bf16[128,128], index: 11, kind: input, shape index: {}]
  %s12 = inlined_call_operand.vmem [shape: f32[1,128], index: 12, kind: input, shape index: {}]
  %s13 = inlined_call_operand.hbm [shape: bf16[128,128], index: 13, kind: input, shape index: {}]
  %s14 = inlined_call_operand.vmem [shape: f32[1,128], index: 14, kind: input, shape index: {}]
  %s15 = inlined_call_operand.vmem [shape: f32[1,128], index: 15, kind: input, shape index: {}]
  %s16 = inlined_call_operand.<no memory space> [shape: f32[1], index: 16, kind: input, shape index: {}]
  %s17 = inlined_call_operand.hbm [shape: f32[8,128], index: 17, kind: output, shape index: {}]
  %s18 = sld [smem:[#allocation0]]
  $region110: #{tpu_custom_call.1} parent=0
    _
  %s20 = ssub.s32 1, %s18
  %s21 = scalar_select 0, %s20, %s18
  %22 = sst [smem:[#allocation3]] %s16
  $region1: #{tpu_custom_call.1} parent=0
    #allocation4 [shape = 'u8[512]{0}', space=smem, size = 0x200, scoped, tag = 'input window, operand 0, single buffered']
    #allocation5 [shape = 's32[1]{0}', space=sflag, size = 0x4, scoped, tag = 'scoped memory for tpu_custom_call.1']
    #allocation6 [shape = 's32[1]{0}', space=sflag, size = 0x4, scoped, tag = 'scoped memory for tpu_custom_call.1']
    #allocation7 [shape = 's32[1]{0}', space=sflag, size = 0x4, scoped, tag = 'scoped memory for tpu_custom_call.1']
    #allocation8 [shape = 'u8[32768]{0}', space=vmem, size = 0x8000, scoped, tag = 'input window, operand 4, single buffered']
    #allocation9 [shape = 'u8[32768]{0}', space=vmem, size = 0x8000, scoped, tag = 'input window, operand 5, single buffered']
    #allocation10 [shape = 's32[1]{0}', space=sflag, size = 0x4, scoped, tag = 'scoped memory for tpu_custom_call.1']
    #allocation11 [shape = 'u8[32768]{0}', space=vmem, size = 0x8000, scoped, tag = 'input window, operand 7, single buffered']
    #allocation12 [shape = 'u8[32768]{0}', space=vmem, size = 0x8000, scoped, tag = 'input window, operand 8, single buffered']
    #allocation13 [shape = 's32[1]{0}', space=sflag, size = 0x4, scoped, tag = 'scoped memory for tpu_custom_call.1']
    #allocation14 [shape = 'u8[32768]{0}', space=vmem, size = 0x8000, scoped, tag = 'input window, operand 10, single buffered']
    #allocation15 [shape = 'u8[32768]{0}', space=vmem, size = 0x8000, scoped, tag = 'input window, operand 11, single buffered']
    #allocation16 [shape = 's32[1]{0}', space=sflag, size = 0x4, scoped, tag = 'scoped memory for tpu_custom_call.1']
    #allocation17 [shape = 'u8[32768]{0}', space=vmem, size = 0x8000, scoped, tag = 'input window, operand 13, single buffered']
    #allocation18 [shape = 'u8[4096]{0}', space=vmem, size = 0x1000, scoped, tag = 'output window, operand 0, single buffered']
    %23 = vsyncpa [#allocation7], 0
    %24 = vsyncpa [#allocation5], 0
    %25 = vsyncpa [#allocation10], 0
    %26 = vsyncpa [#allocation13], 0
    %27 = vsyncpa [#allocation16], 0
    %28 = vsyncpa [#allocation6], 0
    // Predicated region
    $region2: #{tpu_custom_call.1} parent=1 // pred_check
      _
    $region3: #{tpu_custom_call.1} parent=1 // pred_check_branch
      %30 = sbr.rel (0) target = $region5
    $region4: #{tpu_custom_call.1} parent=1 // pred_region
      %32 = vsyncadd [#allocation7], 0
      %s34 = sshll.u32 %s0, 4
      %s35 = int_to_ptr.vmem [resolvable:$true] %s34
      %37 = dma.vmem_to_smem %s35, 16, [#allocation4], [#allocation7]
    $region5: #{tpu_custom_call.1} parent=1 // pred_fallthru
      _
    // Predicated region
    $region6: #{tpu_custom_call.1} parent=1 // pred_check
      _
    $region7: #{tpu_custom_call.1} parent=1 // pred_check_branch
      %39 = sbr.rel (0) target = $region9
    $region8: #{tpu_custom_call.1} parent=1 // pred_region
      _
    $region9: #{tpu_custom_call.1} parent=1 // pred_fallthru
      _
    // Predicated region
    $region10: #{tpu_custom_call.1} parent=1 // pred_check
      _
    $region11: #{tpu_custom_call.1} parent=1 // pred_check_branch
      %41 = sbr.rel (0) target = $region13
    $region12: #{tpu_custom_call.1} parent=1 // pred_region
      _
    $region13: #{tpu_custom_call.1} parent=1 // pred_fallthru
      _
    // Predicated region
    $region14: #{tpu_custom_call.1} parent=1 // pred_check
      _
    $region15: #{tpu_custom_call.1} parent=1 // pred_check_branch
      %43 = sbr.rel (0) target = $region17
    $region16: #{tpu_custom_call.1} parent=1 // pred_region
      _
    $region17: #{tpu_custom_call.1} parent=1 // pred_fallthru
      _
    // Predicated region
    $region18: #{tpu_custom_call.1} parent=1 // pred_check
      _
    $region19: #{tpu_custom_call.1} parent=1 // pred_check_branch
      %45 = sbr.rel (0) target = $region21
    $region20: #{tpu_custom_call.1} parent=1 // pred_region
      %47 = vsyncadd [#allocation5], 0
      %s48 = sshll.u32 %s4, 4
      %s49 = int_to_ptr.hbm [resolvable:$true] %s48
      %s50 = sshll.u32 [#allocation8], 4
      %s51 = int_to_ptr.vmem [resolvable:$true] %s50
      %56 = dma.hbm_to_vmem [thread:$0]  %s49, 1024, %s51, [#allocation5], 64, 64, 4
    $region21: #{tpu_custom_call.1} parent=1 // pred_fallthru
      _
    // Predicated region
    $region22: #{tpu_custom_call.1} parent=1 // pred_check
      _
    $region23: #{tpu_custom_call.1} parent=1 // pred_check_branch
      %58 = sbr.rel (0) target = $region25
    $region24: #{tpu_custom_call.1} parent=1 // pred_region
      %60 = vsyncadd [#allocation10], 0
      %s61 = sshll.u32 %s5, 4
      %s62 = int_to_ptr.hbm [resolvable:$true] %s61
      %s63 = sshll.u32 [#allocation9], 4
      %s64 = int_to_ptr.vmem [resolvable:$true] %s63
      %69 = dma.hbm_to_vmem [thread:$0]  %s62, 1024, %s64, [#allocation10], 64, 64, 4
    $region25: #{tpu_custom_call.1} parent=1 // pred_fallthru
      _
    // Predicated region
    $region26: #{tpu_custom_call.1} parent=1 // pred_check
      _
    $region27: #{tpu_custom_call.1} parent=1 // pred_check_branch
      %71 = sbr.rel (0) target = $region29
    $region28: #{tpu_custom_call.1} parent=1 // pred_region
      _
    $region29: #{tpu_custom_call.1} parent=1 // pred_fallthru
      _
    // Predicated region
    $region30: #{tpu_custom_call.1} parent=1 // pred_check
      _
    $region31: #{tpu_custom_call.1} parent=1 // pred_check_branch
      %73 = sbr.rel (0) target = $region33
    $region32: #{tpu_custom_call.1} parent=1 // pred_region
      %75 = vsyncadd [#allocation10], 0
      %s76 = sshll.u32 %s7, 4
      %s77 = int_to_ptr.hbm [resolvable:$true] %s76
      %s78 = sshll.u32 [#allocation11], 4
      %s79 = int_to_ptr.vmem [resolvable:$true] %s78
      %84 = dma.hbm_to_vmem [thread:$0]  %s77, 1024, %s79, [#allocation10], 64, 64, 4
    $region33: #{tpu_custom_call.1} parent=1 // pred_fallthru
      _
    // Predicated region
    $region34: #{tpu_custom_call.1} parent=1 // pred_check
      _
    $region35: #{tpu_custom_call.1} parent=1 // pred_check_branch
      %86 = sbr.rel (0) target = $region37
    $region36: #{tpu_custom_call.1} parent=1 // pred_region
      %88 = vsyncadd [#allocation13], 0
      %s89 = sshll.u32 %s8, 4
      %s90 = int_to_ptr.hbm [resolvable:$true] %s89
      %s91 = sshll.u32 [#allocation12], 4
      %s92 = int_to_ptr.vmem [resolvable:$true] %s91
      %97 = dma.hbm_to_vmem [thread:$0]  %s90, 1024, %s92, [#allocation13], 64, 64, 4
    $region37: #{tpu_custom_call.1} parent=1 // pred_fallthru
      _
    // Predicated region
    $region38: #{tpu_custom_call.1} parent=1 // pred_check
      _
    $region39: #{tpu_custom_call.1} parent=1 // pred_check_branch
      %99 = sbr.rel (0) target = $region41
    $region40: #{tpu_custom_call.1} parent=1 // pred_region
      _
    $region41: #{tpu_custom_call.1} parent=1 // pred_fallthru
      _
    // Predicated region
    $region42: #{tpu_custom_call.1} parent=1 // pred_check
      _
    $region43: #{tpu_custom_call.1} parent=1 // pred_check_branch
      %101 = sbr.rel (0) target = $region45
    $region44: #{tpu_custom_call.1} parent=1 // pred_region
      %103 = vsyncadd [#allocation13], 0
      %s104 = sshll.u32 %s10, 4
      %s105 = int_to_ptr.hbm [resolvable:$true] %s104
      %s106 = sshll.u32 [#allocation14], 4
      %s107 = int_to_ptr.vmem [resolvable:$true] %s106
      %112 = dma.hbm_to_vmem [thread:$0]  %s105, 1024, %s107, [#allocation13], 64, 64, 4
    $region45: #{tpu_custom_call.1} parent=1 // pred_fallthru
      _
    // Predicated region
    $region46: #{tpu_custom_call.1} parent=1 // pred_check
      _
    $region47: #{tpu_custom_call.1} parent=1 // pred_check_branch
      %114 = sbr.rel (0) target = $region49
    $region48: #{tpu_custom_call.1} parent=1 // pred_region
      %116 = vsyncadd [#allocation16], 0
      %s117 = sshll.u32 %s11, 4
      %s118 = int_to_ptr.hbm [resolvable:$true] %s117
      %s119 = sshll.u32 [#allocation15], 4
      %s120 = int_to_ptr.vmem [resolvable:$true] %s119
      %125 = dma.hbm_to_vmem [thread:$0]  %s118, 1024, %s120, [#allocation16], 64, 64, 4
    $region49: #{tpu_custom_call.1} parent=1 // pred_fallthru
      _
    // Predicated region
    $region50: #{tpu_custom_call.1} parent=1 // pred_check
      _
    $region51: #{tpu_custom_call.1} parent=1 // pred_check_branch
      %127 = sbr.rel (0) target = $region53
    $region52: #{tpu_custom_call.1} parent=1 // pred_region
      _
    $region53: #{tpu_custom_call.1} parent=1 // pred_fallthru
      _
    // Predicated region
    $region54: #{tpu_custom_call.1} parent=1 // pred_check
      _
    $region55: #{tpu_custom_call.1} parent=1 // pred_check_branch
      %129 = sbr.rel (0) target = $region57
    $region56: #{tpu_custom_call.1} parent=1 // pred_region
      %131 = vsyncadd [#allocation16], 0
      %s132 = sshll.u32 %s13, 4
      %s133 = int_to_ptr.hbm [resolvable:$true] %s132
      %s134 = sshll.u32 [#allocation17], 4
      %s135 = int_to_ptr.vmem [resolvable:$true] %s134
      %140 = dma.hbm_to_vmem [thread:$0]  %s133, 1024, %s135, [#allocation16], 64, 64, 4
    $region57: #{tpu_custom_call.1} parent=1 // pred_fallthru
      _
    // Predicated region
    $region58: #{tpu_custom_call.1} parent=1 // pred_check
      _
    $region59: #{tpu_custom_call.1} parent=1 // pred_check_branch
      %142 = sbr.rel (0) target = $region61
    $region60: #{tpu_custom_call.1} parent=1 // pred_region
      _
    $region61: #{tpu_custom_call.1} parent=1 // pred_fallthru
      _
    // Predicated region
    $region62: #{tpu_custom_call.1} parent=1 // pred_check
      _
    $region63: #{tpu_custom_call.1} parent=1 // pred_check_branch
      %144 = sbr.rel (0) target = $region65
    $region64: #{tpu_custom_call.1} parent=1 // pred_region
      _
    $region65: #{tpu_custom_call.1} parent=1 // pred_fallthru
      _
    // Predicated region
    $region66: #{tpu_custom_call.1} parent=1 // pred_check
      _
    $region67: #{tpu_custom_call.1} parent=1 // pred_check_branch
      %146 = sbr.rel (0) target = $region69
    $region68: #{tpu_custom_call.1} parent=1 // pred_region
      _
    $region69: #{tpu_custom_call.1} parent=1 // pred_fallthru
      _
    // Predicated region
    $region70: #{tpu_custom_call.1} parent=1 // pred_check
      _
    $region71: #{tpu_custom_call.1} parent=1 // pred_check_branch
      %148 = sbr.rel (0) target = $region73
    $region72: #{tpu_custom_call.1} parent=1 // pred_region
      %150 = dma.done [#allocation7], 16
    $region73: #{tpu_custom_call.1} parent=1 // pred_fallthru
      _
    // Predicated region
    $region74: #{tpu_custom_call.1} parent=1 // pred_check
      _
    $region75: #{tpu_custom_call.1} parent=1 // pred_check_branch
      %152 = sbr.rel (0) target = $region77
    $region76: #{tpu_custom_call.1} parent=1 // pred_region
      %154 = dma.done [#allocation5], 1024
    $region77: #{tpu_custom_call.1} parent=1 // pred_fallthru
      _
    // Predicated region
    $region78: #{tpu_custom_call.1} parent=1 // pred_check
      _
    $region79: #{tpu_custom_call.1} parent=1 // pred_check_branch
      %156 = sbr.rel (0) target = $region81
    $region80: #{tpu_custom_call.1} parent=1 // pred_region
      %158 = dma.done [#allocation10], 1024
    $region81: #{tpu_custom_call.1} parent=1 // pred_fallthru
      _
    // Predicated region
    $region82: #{tpu_custom_call.1} parent=1 // pred_check
      _
    $region83: #{tpu_custom_call.1} parent=1 // pred_check_branch
      %160 = sbr.rel (0) target = $region85
    $region84: #{tpu_custom_call.1} parent=1 // pred_region
      %162 = dma.done [#allocation10], 1024
    $region85: #{tpu_custom_call.1} parent=1 // pred_fallthru
      _
    // Predicated region
    $region86: #{tpu_custom_call.1} parent=1 // pred_check
      _
    $region87: #{tpu_custom_call.1} parent=1 // pred_check_branch
      %164 = sbr.rel (0) target = $region89
    $region88: #{tpu_custom_call.1} parent=1 // pred_region
      %166 = dma.done [#allocation13], 1024
    $region89: #{tpu_custom_call.1} parent=1 // pred_fallthru
      _
    // Predicated region
    $region90: #{tpu_custom_call.1} parent=1 // pred_check
      _
    $region91: #{tpu_custom_call.1} parent=1 // pred_check_branch
      %168 = sbr.rel (0) target = $region93
    $region92: #{tpu_custom_call.1} parent=1 // pred_region
      %170 = dma.done [#allocation13], 1024
    $region93: #{tpu_custom_call.1} parent=1 // pred_fallthru
      _
    // Predicated region
    $region94: #{tpu_custom_call.1} parent=1 // pred_check
      _
    $region95: #{tpu_custom_call.1} parent=1 // pred_check_branch
      %172 = sbr.rel (0) target = $region97
    $region96: #{tpu_custom_call.1} parent=1 // pred_region
      %174 = dma.done [#allocation16], 1024
    $region97: #{tpu_custom_call.1} parent=1 // pred_fallthru
      _
    // Predicated region
    $region98: #{tpu_custom_call.1} parent=1 // pred_check
      _
    $region99: #{tpu_custom_call.1} parent=1 // pred_check_branch
      %176 = sbr.rel (0) target = $region101
    $region100: #{tpu_custom_call.1} parent=1 // pred_region
      %178 = dma.done [#allocation16], 1024
    $region101: #{tpu_custom_call.1} parent=1 // pred_fallthru
      _
    %179 = sfence
    %v180 = vld [vmem:[%s1] sm:$0xf]
    %v181 = vld [vmem:[%s1 + $0x4] sm:$0xf]
    %v182 = vld [vmem:[%s1 + $0x8] sm:$0xf]
    %v183 = vld [vmem:[%s1 + $0xc] sm:$0xf]
    %v184 = vld [vmem:[%s1 + $0x10] sm:$0xf]
    %v185 = vld [vmem:[%s1 + $0x14] sm:$0xf]
    %v186 = vld [vmem:[%s1 + $0x18] sm:$0xf]
    %v187 = vld [vmem:[%s1 + $0x1c] sm:$0xf]
    %v188 = vld [vmem:[%s1 + $0x20] sm:$0xf]
    %v189 = vld [vmem:[%s1 + $0x24] sm:$0xf]
    %v190 = vld [vmem:[%s1 + $0x28] sm:$0xf]
    %v191 = vld [vmem:[%s1 + $0x2c] sm:$0xf]
    %v192 = vld [vmem:[%s1 + $0x30] sm:$0xf]
    %v193 = vld [vmem:[%s1 + $0x34] sm:$0xf]
    %v194 = vld [vmem:[%s1 + $0x38] sm:$0xf]
    %v195 = vld [vmem:[%s1 + $0x3c] sm:$0xf]
    %v196 = vld [vmem:[%s2] sm:$0xff]
    %v197 = vld [vmem:[%s2 + $0x8] sm:$0xff]
    %v198 = vld [vmem:[%s2 + $0x10] sm:$0xff]
    %v199 = vld [vmem:[%s2 + $0x18] sm:$0xff]
    %v200 = vld [vmem:[%s2 + $0x20] sm:$0xff]
    %v201 = vld [vmem:[%s2 + $0x28] sm:$0xff]
    %v202 = vld [vmem:[%s2 + $0x30] sm:$0xff]
    %v203 = vld [vmem:[%s2 + $0x38] sm:$0xff]
    %v204 = vld [vmem:[%s2 + $0x40] sm:$0xff]
    %v205 = vld [vmem:[%s2 + $0x48] sm:$0xff]
    %v206 = vld [vmem:[%s2 + $0x50] sm:$0xff]
    %v207 = vld [vmem:[%s2 + $0x58] sm:$0xff]
    %v208 = vld [vmem:[%s2 + $0x60] sm:$0xff]
    %v209 = vld [vmem:[%s2 + $0x68] sm:$0xff]
    %v210 = vld [vmem:[%s2 + $0x70] sm:$0xff]
    %v211 = vld [vmem:[%s2 + $0x78] sm:$0xff]
    %v212 = vld [vmem:[%s3] sm:$0xf]
    %v213 = vld [vmem:[%s3 + $0x4] sm:$0xf]
    %v214 = vld [vmem:[%s3 + $0x8] sm:$0xf]
    %v215 = vld [vmem:[%s3 + $0xc] sm:$0xf]
    %v216 = vld [vmem:[%s3 + $0x10] sm:$0xf]
    %v217 = vld [vmem:[%s3 + $0x14] sm:$0xf]
    %v218 = vld [vmem:[%s3 + $0x18] sm:$0xf]
    %v219 = vld [vmem:[%s3 + $0x1c] sm:$0xf]
    %v220 = vld [vmem:[%s3 + $0x20] sm:$0xf]
    %v221 = vld [vmem:[%s3 + $0x24] sm:$0xf]
    %v222 = vld [vmem:[%s3 + $0x28] sm:$0xf]
    %v223 = vld [vmem:[%s3 + $0x2c] sm:$0xf]
    %v224 = vld [vmem:[%s3 + $0x30] sm:$0xf]
    %v225 = vld [vmem:[%s3 + $0x34] sm:$0xf]
    %v226 = vld [vmem:[%s3 + $0x38] sm:$0xf]
    %v227 = vld [vmem:[%s3 + $0x3c] sm:$0xf]
    %v228 = vld [vmem:[#allocation8] sm:$0xf]
    %v229 = vld [vmem:[#allocation8 + $0x4] sm:$0xf]
    %v230 = vld [vmem:[#allocation8 + $0x8] sm:$0xf]
    %v231 = vld [vmem:[#allocation8 + $0xc] sm:$0xf]
    %v232 = vld [vmem:[#allocation8 + $0x10] sm:$0xf]
    %v233 = vld [vmem:[#allocation8 + $0x14] sm:$0xf]
    %v234 = vld [vmem:[#allocation8 + $0x18] sm:$0xf]
    %v235 = vld [vmem:[#allocation8 + $0x1c] sm:$0xf]
    %v236 = vld [vmem:[#allocation8 + $0x20] sm:$0xf]
    %v237 = vld [vmem:[#allocation8 + $0x24] sm:$0xf]
    %v238 = vld [vmem:[#allocation8 + $0x28] sm:$0xf]
    %v239 = vld [vmem:[#allocation8 + $0x2c] sm:$0xf]
    %v240 = vld [vmem:[#allocation8 + $0x30] sm:$0xf]
    %v241 = vld [vmem:[#allocation8 + $0x34] sm:$0xf]
    %v242 = vld [vmem:[#allocation8 + $0x38] sm:$0xf]
    %v243 = vld [vmem:[#allocation8 + $0x3c] sm:$0xf]
    %v244 = vld [vmem:[#allocation9] sm:$0xf]
    %v245 = vld [vmem:[#allocation9 + $0x4] sm:$0xf]
    %v246 = vld [vmem:[#allocation9 + $0x8] sm:$0xf]
    %v247 = vld [vmem:[#allocation9 + $0xc] sm:$0xf]
    %v248 = vld [vmem:[#allocation9 + $0x10] sm:$0xf]
    %v249 = vld [vmem:[#allocation9 + $0x14] sm:$0xf]
    %v250 = vld [vmem:[#allocation9 + $0x18] sm:$0xf]
    %v251 = vld [vmem:[#allocation9 + $0x1c] sm:$0xf]
    %v252 = vld [vmem:[#allocation9 + $0x20] sm:$0xf]
    %v253 = vld [vmem:[#allocation9 + $0x24] sm:$0xf]
    %v254 = vld [vmem:[#allocation9 + $0x28] sm:$0xf]
    %v255 = vld [vmem:[#allocation9 + $0x2c] sm:$0xf]
    %v256 = vld [vmem:[#allocation9 + $0x30] sm:$0xf]
    %v257 = vld [vmem:[#allocation9 + $0x34] sm:$0xf]
    %v258 = vld [vmem:[#allocation9 + $0x38] sm:$0xf]
    %v259 = vld [vmem:[#allocation9 + $0x3c] sm:$0xf]
    %v260 = vld [vmem:[%s6] sm:$0x1]
    %v277 = vunpack.c.l.b16 %v180
    %v278 = vunpack.c.l.b16 %v181
    %v279 = vunpack.c.l.b16 %v182
    %v280 = vunpack.c.l.b16 %v183
    %v281 = vunpack.c.l.b16 %v184
    %v282 = vunpack.c.l.b16 %v185
    %v283 = vunpack.c.l.b16 %v186
    %v284 = vunpack.c.l.b16 %v187
    %v285 = vunpack.c.l.b16 %v188
    %v286 = vunpack.c.l.b16 %v189
    %v287 = vunpack.c.l.b16 %v190
    %v288 = vunpack.c.l.b16 %v191
    %v289 = vunpack.c.l.b16 %v192
    %v290 = vunpack.c.l.b16 %v193
    %v291 = vunpack.c.l.b16 %v194
    %v292 = vunpack.c.l.b16 %v195
    %v293 = vpack.c.b16 %v278, %v277
    %v294 = vpack.c.b16 %v280, %v279
    %v295 = vpack.c.b16 %v282, %v281
    %v296 = vpack.c.b16 %v284, %v283
    %v297 = vpack.c.b16 %v286, %v285
    %v298 = vpack.c.b16 %v288, %v287
    %v299 = vpack.c.b16 %v290, %v289
    %v300 = vpack.c.b16 %v292, %v291
    %v325 = vunpack.c.l.b16 %v212
    %v326 = vunpack.c.l.b16 %v213
    %v327 = vunpack.c.l.b16 %v214
    %v328 = vunpack.c.l.b16 %v215
    %v329 = vunpack.c.l.b16 %v216
    %v330 = vunpack.c.l.b16 %v217
    %v331 = vunpack.c.l.b16 %v218
    %v332 = vunpack.c.l.b16 %v219
    %v333 = vunpack.c.l.b16 %v220
    %v334 = vunpack.c.l.b16 %v221
    %v335 = vunpack.c.l.b16 %v222
    %v336 = vunpack.c.l.b16 %v223
    %v337 = vunpack.c.l.b16 %v224
    %v338 = vunpack.c.l.b16 %v225
    %v339 = vunpack.c.l.b16 %v226
    %v340 = vunpack.c.l.b16 %v227
    %v341 = vpack.c.b16 %v326, %v325
    %v342 = vpack.c.b16 %v328, %v327
    %v343 = vpack.c.b16 %v330, %v329
    %v344 = vpack.c.b16 %v332, %v331
    %v345 = vpack.c.b16 %v334, %v333
    %v346 = vpack.c.b16 %v336, %v335
    %v347 = vpack.c.b16 %v338, %v337
    %v348 = vpack.c.b16 %v340, %v339
    %357 = vmatpush.bf16.msra.mxu0 %v348
    %358 = vmatpush.bf16.msra.mxu0 %v347
    %359 = vmatpush.bf16.msra.mxu0 %v346
    %360 = vmatpush.bf16.msra.mxu0 %v345
    %361 = vmatpush.bf16.msra.mxu0 %v344
    %362 = vmatpush.bf16.msra.mxu0 %v343
    %363 = vmatpush.bf16.msra.mxu0 %v342
    %364 = vmatpush.bf16.msra.mxu0 %v341
    %365 = vmatmul.bf16.gmra.mxu0 %v293
    %v366 = vpop.f32.mrf.mxu0
    %v367 = vadd.f32 0.0, %v366
    %v368 = vpop.f32.mrf.mxu0
    %v369 = vadd.f32 0.0, %v368
    %370 = vmatmul.bf16.gmra.mxu0 %v294
    %v371 = vpop.f32.mrf.mxu0
    %v372 = vadd.f32 0.0, %v371
    %v373 = vpop.f32.mrf.mxu0
    %v374 = vadd.f32 0.0, %v373
    %375 = vmatmul.bf16.gmra.mxu0 %v295
    %v376 = vpop.f32.mrf.mxu0
    %v377 = vadd.f32 0.0, %v376
    %v378 = vpop.f32.mrf.mxu0
    %v379 = vadd.f32 0.0, %v378
    %380 = vmatmul.bf16.gmra.mxu0 %v296
    %v381 = vpop.f32.mrf.mxu0
    %v382 = vadd.f32 0.0, %v381
    %v383 = vpop.f32.mrf.mxu0
    %v384 = vadd.f32 0.0, %v383
    %385 = vmatmul.bf16.gmra.mxu0 %v297
    %v386 = vpop.f32.mrf.mxu0
    %v387 = vadd.f32 0.0, %v386
    %v388 = vpop.f32.mrf.mxu0
    %v389 = vadd.f32 0.0, %v388
    %390 = vmatmul.bf16.gmra.mxu0 %v298
    %v391 = vpop.f32.mrf.mxu0
    %v392 = vadd.f32 0.0, %v391
    %v393 = vpop.f32.mrf.mxu0
    %v394 = vadd.f32 0.0, %v393
    %395 = vmatmul.bf16.gmra.mxu0 %v299
    %v396 = vpop.f32.mrf.mxu0
    %v397 = vadd.f32 0.0, %v396
    %v398 = vpop.f32.mrf.mxu0
    %v399 = vadd.f32 0.0, %v398
    %400 = vmatmul.bf16.gmra.mxu0 %v300
    %v401 = vpop.f32.mrf.mxu0
    %v402 = vadd.f32 0.0, %v401
    %v403 = vpop.f32.mrf.mxu0
    %v404 = vadd.f32 0.0, %v403
    %405 = vdwg.mxu0
    %407 = vset.pattern.permute.xlu0 0
    %408 = vperm.xlu0 %407, %v196
    %v409 = vpop.permute.xlu0 %408
    %412 = vset.pattern.permute.xlu0 0
    %413 = vperm.xlu0 %412, %v197
    %v414 = vpop.permute.xlu0 %413
    %417 = vset.pattern.permute.xlu0 0
    %418 = vperm.xlu0 %417, %v198
    %v419 = vpop.permute.xlu0 %418
    %422 = vset.pattern.permute.xlu0 0
    %423 = vperm.xlu0 %422, %v199
    %v424 = vpop.permute.xlu0 %423
    %427 = vset.pattern.permute.xlu0 0
    %428 = vperm.xlu0 %427, %v200
    %v429 = vpop.permute.xlu0 %428
    %432 = vset.pattern.permute.xlu0 0
    %433 = vperm.xlu0 %432, %v201
    %v434 = vpop.permute.xlu0 %433
    %437 = vset.pattern.permute.xlu0 0
    %438 = vperm.xlu0 %437, %v202
    %v439 = vpop.permute.xlu0 %438
    %442 = vset.pattern.permute.xlu0 0
    %443 = vperm.xlu0 %442, %v203
    %v444 = vpop.permute.xlu0 %443
    %447 = vset.pattern.permute.xlu0 0
    %448 = vperm.xlu0 %447, %v204
    %v449 = vpop.permute.xlu0 %448
    %452 = vset.pattern.permute.xlu0 0
    %453 = vperm.xlu0 %452, %v205
    %v454 = vpop.permute.xlu0 %453
    %457 = vset.pattern.permute.xlu0 0
    %458 = vperm.xlu0 %457, %v206
    %v459 = vpop.permute.xlu0 %458
    %462 = vset.pattern.permute.xlu0 0
    %463 = vperm.xlu0 %462, %v207
    %v464 = vpop.permute.xlu0 %463
    %467 = vset.pattern.permute.xlu0 0
    %468 = vperm.xlu0 %467, %v208
    %v469 = vpop.permute.xlu0 %468
    %472 = vset.pattern.permute.xlu0 0
    %473 = vperm.xlu0 %472, %v209
    %v474 = vpop.permute.xlu0 %473
    %477 = vset.pattern.permute.xlu0 0
    %478 = vperm.xlu0 %477, %v210
    %v479 = vpop.permute.xlu0 %478
    %482 = vset.pattern.permute.xlu0 0
    %483 = vperm.xlu0 %482, %v211
    %v484 = vpop.permute.xlu0 %483
    %v486 = vmul.f32 %v367, %v409
    %v487 = vmul.f32 %v369, %v414
    %v488 = vmul.f32 %v372, %v419
    %v489 = vmul.f32 %v374, %v424
    %v490 = vmul.f32 %v377, %v429
    %v491 = vmul.f32 %v379, %v434
    %v492 = vmul.f32 %v382, %v439
    %v493 = vmul.f32 %v384, %v444
    %v494 = vmul.f32 %v387, %v449
    %v495 = vmul.f32 %v389, %v454
    %v496 = vmul.f32 %v392, %v459
    %v497 = vmul.f32 %v394, %v464
    %v498 = vmul.f32 %v397, %v469
    %v499 = vmul.f32 %v399, %v474
    %v500 = vmul.f32 %v402, %v479
    %v501 = vmul.f32 %v404, %v484
    %v502 = vpack.c.bf16 %v487, %v486
    %v503 = vpack.c.bf16 %v489, %v488
    %v504 = vpack.c.bf16 %v491, %v490
    %v505 = vpack.c.bf16 %v493, %v492
    %v506 = vpack.c.bf16 %v495, %v494
    %v507 = vpack.c.bf16 %v497, %v496
    %v508 = vpack.c.bf16 %v499, %v498
    %v509 = vpack.c.bf16 %v501, %v500
    %v526 = vunpack.c.l.b16 %v244
    %v527 = vunpack.c.l.b16 %v245
    %v528 = vunpack.c.l.b16 %v246
    %v529 = vunpack.c.l.b16 %v247
    %v530 = vunpack.c.l.b16 %v248
    %v531 = vunpack.c.l.b16 %v249
    %v532 = vunpack.c.l.b16 %v250
    %v533 = vunpack.c.l.b16 %v251
    %v534 = vunpack.c.l.b16 %v252
    %v535 = vunpack.c.l.b16 %v253
    %v536 = vunpack.c.l.b16 %v254
    %v537 = vunpack.c.l.b16 %v255
    %v538 = vunpack.c.l.b16 %v256
    %v539 = vunpack.c.l.b16 %v257
    %v540 = vunpack.c.l.b16 %v258
    %v541 = vunpack.c.l.b16 %v259
    %v542 = vpack.c.b16 %v527, %v526
    %v543 = vpack.c.b16 %v529, %v528
    %v544 = vpack.c.b16 %v531, %v530
    %v545 = vpack.c.b16 %v533, %v532
    %v546 = vpack.c.b16 %v535, %v534
    %v547 = vpack.c.b16 %v537, %v536
    %v548 = vpack.c.b16 %v539, %v538
    %v549 = vpack.c.b16 %v541, %v540
    %558 = vmatpush.bf16.msra.mxu0 %v549
    %559 = vmatpush.bf16.msra.mxu0 %v548
    %560 = vmatpush.bf16.msra.mxu0 %v547
    %561 = vmatpush.bf16.msra.mxu0 %v546
    %562 = vmatpush.bf16.msra.mxu0 %v545
    %563 = vmatpush.bf16.msra.mxu0 %v544
    %564 = vmatpush.bf16.msra.mxu0 %v543
    %565 = vmatpush.bf16.msra.mxu0 %v542
    %566 = vmatmul.bf16.gmra.mxu0 %v341
    %v567 = vpop.f32.mrf.mxu0
    %v568 = vadd.f32 0.0, %v567
    %v569 = vpop.f32.mrf.mxu0
    %v570 = vadd.f32 0.0, %v569
    %571 = vmatmul.bf16.gmra.mxu0 %v342
    %v572 = vpop.f32.mrf.mxu0
    %v573 = vadd.f32 0.0, %v572
    %v574 = vpop.f32.mrf.mxu0
    %v575 = vadd.f32 0.0, %v574
    %576 = vmatmul.bf16.gmra.mxu0 %v343
    %v577 = vpop.f32.mrf.mxu0
    %v578 = vadd.f32 0.0, %v577
    %v579 = vpop.f32.mrf.mxu0
    %v580 = vadd.f32 0.0, %v579
    %581 = vmatmul.bf16.gmra.mxu0 %v344
    %v582 = vpop.f32.mrf.mxu0
    %v583 = vadd.f32 0.0, %v582
    %v584 = vpop.f32.mrf.mxu0
    %v585 = vadd.f32 0.0, %v584
    %586 = vmatmul.bf16.gmra.mxu0 %v345
    %v587 = vpop.f32.mrf.mxu0
    %v588 = vadd.f32 0.0, %v587
    %v589 = vpop.f32.mrf.mxu0
    %v590 = vadd.f32 0.0, %v589
    %591 = vmatmul.bf16.gmra.mxu0 %v346
    %v592 = vpop.f32.mrf.mxu0
    %v593 = vadd.f32 0.0, %v592
    %v594 = vpop.f32.mrf.mxu0
    %v595 = vadd.f32 0.0, %v594
    %596 = vmatmul.bf16.gmra.mxu0 %v347
    %v597 = vpop.f32.mrf.mxu0
    %v598 = vadd.f32 0.0, %v597
    %v599 = vpop.f32.mrf.mxu0
    %v600 = vadd.f32 0.0, %v599
    %601 = vmatmul.bf16.gmra.mxu0 %v348
    %v602 = vpop.f32.mrf.mxu0
    %v603 = vadd.f32 0.0, %v602
    %v604 = vpop.f32.mrf.mxu0
    %v605 = vadd.f32 0.0, %v604
    %606 = vdwg.mxu0
    %v623 = vunpack.c.l.b16 %v228
    %v624 = vunpack.c.l.b16 %v229
    %v625 = vunpack.c.l.b16 %v230
    %v626 = vunpack.c.l.b16 %v231
    %v627 = vunpack.c.l.b16 %v232
    %v628 = vunpack.c.l.b16 %v233
    %v629 = vunpack.c.l.b16 %v234
    %v630 = vunpack.c.l.b16 %v235
    %v631 = vunpack.c.l.b16 %v236
    %v632 = vunpack.c.l.b16 %v237
    %v633 = vunpack.c.l.b16 %v238
    %v634 = vunpack.c.l.b16 %v239
    %v635 = vunpack.c.l.b16 %v240
    %v636 = vunpack.c.l.b16 %v241
    %v637 = vunpack.c.l.b16 %v242
    %v638 = vunpack.c.l.b16 %v243
    %v639 = vpack.c.b16 %v624, %v623
    %v640 = vpack.c.b16 %v626, %v625
    %v641 = vpack.c.b16 %v628, %v627
    %v642 = vpack.c.b16 %v630, %v629
    %v643 = vpack.c.b16 %v632, %v631
    %v644 = vpack.c.b16 %v634, %v633
    %v645 = vpack.c.b16 %v636, %v635
    %v646 = vpack.c.b16 %v638, %v637
    %655 = vmatpush.bf16.msra.mxu0 %v646
    %656 = vmatpush.bf16.msra.mxu0 %v645
    %657 = vmatpush.bf16.msra.mxu0 %v644
    %658 = vmatpush.bf16.msra.mxu0 %v643
    %659 = vmatpush.bf16.msra.mxu0 %v642
    %660 = vmatpush.bf16.msra.mxu0 %v641
    %661 = vmatpush.bf16.msra.mxu0 %v640
    %662 = vmatpush.bf16.msra.mxu0 %v639
    %663 = vmatmul.bf16.gmra.mxu0 %v502
    %v664 = vpop.f32.mrf.mxu0
    %v665 = vadd.f32 %v568, %v664
    %v666 = vpop.f32.mrf.mxu0
    %v667 = vadd.f32 %v570, %v666
    %668 = vmatmul.bf16.gmra.mxu0 %v503
    %v669 = vpop.f32.mrf.mxu0
    %v670 = vadd.f32 %v573, %v669
    %v671 = vpop.f32.mrf.mxu0
    %v672 = vadd.f32 %v575, %v671
    %673 = vmatmul.bf16.gmra.mxu0 %v504
    %v674 = vpop.f32.mrf.mxu0
    %v675 = vadd.f32 %v578, %v674
    %v676 = vpop.f32.mrf.mxu0
    %v677 = vadd.f32 %v580, %v676
    %678 = vmatmul.bf16.gmra.mxu0 %v505
    %v679 = vpop.f32.mrf.mxu0
    %v680 = vadd.f32 %v583, %v679
    %v681 = vpop.f32.mrf.mxu0
    %v682 = vadd.f32 %v585, %v681
    %683 = vmatmul.bf16.gmra.mxu0 %v506
    %v684 = vpop.f32.mrf.mxu0
    %v685 = vadd.f32 %v588, %v684
    %v686 = vpop.f32.mrf.mxu0
    %v687 = vadd.f32 %v590, %v686
    %688 = vmatmul.bf16.gmra.mxu0 %v507
    %v689 = vpop.f32.mrf.mxu0
    %v690 = vadd.f32 %v593, %v689
    %v691 = vpop.f32.mrf.mxu0
    %v692 = vadd.f32 %v595, %v691
    %693 = vmatmul.bf16.gmra.mxu0 %v508
    %v694 = vpop.f32.mrf.mxu0
    %v695 = vadd.f32 %v598, %v694
    %v696 = vpop.f32.mrf.mxu0
    %v697 = vadd.f32 %v600, %v696
    %698 = vmatmul.bf16.gmra.mxu0 %v509
    %v699 = vpop.f32.mrf.mxu0
    %v700 = vadd.f32 %v603, %v699
    %v701 = vpop.f32.mrf.mxu0
    %v702 = vadd.f32 %v605, %v701
    %703 = vdwg.mxu0
    %v705 = vperm.slane %v260, 0
    %v707 = vadd.f32 %v665, %v705
    %v708 = vadd.f32 %v667, %v705
    %v709 = vadd.f32 %v670, %v705
    %v710 = vadd.f32 %v672, %v705
    %v711 = vadd.f32 %v675, %v705
    %v712 = vadd.f32 %v677, %v705
    %v713 = vadd.f32 %v680, %v705
    %v714 = vadd.f32 %v682, %v705
    %v715 = vadd.f32 %v685, %v705
    %v716 = vadd.f32 %v687, %v705
    %v717 = vadd.f32 %v690, %v705
    %v718 = vadd.f32 %v692, %v705
    %v719 = vadd.f32 %v695, %v705
    %v720 = vadd.f32 %v697, %v705
    %v721 = vadd.f32 %v700, %v705
    %v722 = vadd.f32 %v702, %v705
    %v723 = vmax.f32 %v707, 0.0
    %v724 = vmax.f32 %v708, 0.0
    %v725 = vmax.f32 %v709, 0.0
    %v726 = vmax.f32 %v710, 0.0
    %v727 = vmax.f32 %v711, 0.0
    %v728 = vmax.f32 %v712, 0.0
    %v729 = vmax.f32 %v713, 0.0
    %v730 = vmax.f32 %v714, 0.0
    %v731 = vmax.f32 %v715, 0.0
    %v732 = vmax.f32 %v716, 0.0
    %v733 = vmax.f32 %v717, 0.0
    %v734 = vmax.f32 %v718, 0.0
    %v735 = vmax.f32 %v719, 0.0
    %v736 = vmax.f32 %v720, 0.0
    %v737 = vmax.f32 %v721, 0.0
    %v738 = vmax.f32 %v722, 0.0
    %v739 = vld [vmem:[#allocation11] sm:$0xf]
    %v740 = vld [vmem:[#allocation11 + $0x4] sm:$0xf]
    %v741 = vld [vmem:[#allocation11 + $0x8] sm:$0xf]
    %v742 = vld [vmem:[#allocation11 + $0xc] sm:$0xf]
    %v743 = vld [vmem:[#allocation11 + $0x10] sm:$0xf]
    %v744 = vld [vmem:[#allocation11 + $0x14] sm:$0xf]
    %v745 = vld [vmem:[#allocation11 + $0x18] sm:$0xf]
    %v746 = vld [vmem:[#allocation11 + $0x1c] sm:$0xf]
    %v747 = vld [vmem:[#allocation11 + $0x20] sm:$0xf]
    %v748 = vld [vmem:[#allocation11 + $0x24] sm:$0xf]
    %v749 = vld [vmem:[#allocation11 + $0x28] sm:$0xf]
    %v750 = vld [vmem:[#allocation11 + $0x2c] sm:$0xf]
    %v751 = vld [vmem:[#allocation11 + $0x30] sm:$0xf]
    %v752 = vld [vmem:[#allocation11 + $0x34] sm:$0xf]
    %v753 = vld [vmem:[#allocation11 + $0x38] sm:$0xf]
    %v754 = vld [vmem:[#allocation11 + $0x3c] sm:$0xf]
    %v755 = vld [vmem:[#allocation12] sm:$0xf]
    %v756 = vld [vmem:[#allocation12 + $0x4] sm:$0xf]
    %v757 = vld [vmem:[#allocation12 + $0x8] sm:$0xf]
    %v758 = vld [vmem:[#allocation12 + $0xc] sm:$0xf]
    %v759 = vld [vmem:[#allocation12 + $0x10] sm:$0xf]
    %v760 = vld [vmem:[#allocation12 + $0x14] sm:$0xf]
    %v761 = vld [vmem:[#allocation12 + $0x18] sm:$0xf]
    %v762 = vld [vmem:[#allocation12 + $0x1c] sm:$0xf]
    %v763 = vld [vmem:[#allocation12 + $0x20] sm:$0xf]
    %v764 = vld [vmem:[#allocation12 + $0x24] sm:$0xf]
    %v765 = vld [vmem:[#allocation12 + $0x28] sm:$0xf]
    %v766 = vld [vmem:[#allocation12 + $0x2c] sm:$0xf]
    %v767 = vld [vmem:[#allocation12 + $0x30] sm:$0xf]
    %v768 = vld [vmem:[#allocation12 + $0x34] sm:$0xf]
    %v769 = vld [vmem:[#allocation12 + $0x38] sm:$0xf]
    %v770 = vld [vmem:[#allocation12 + $0x3c] sm:$0xf]
    %v771 = vld [vmem:[%s9] sm:$0x1]
    %v772 = vpack.c.bf16 %v724, %v723
    %v773 = vpack.c.bf16 %v726, %v725
    %v774 = vpack.c.bf16 %v728, %v727
    %v775 = vpack.c.bf16 %v730, %v729
    %v776 = vpack.c.bf16 %v732, %v731
    %v777 = vpack.c.bf16 %v734, %v733
    %v778 = vpack.c.bf16 %v736, %v735
    %v779 = vpack.c.bf16 %v738, %v737
    %780 = vmatpush.bf16.msra.mxu0 %v779
    %781 = vmatpush.bf16.msra.mxu0 %v778
    %782 = vmatpush.bf16.msra.mxu0 %v777
    %783 = vmatpush.bf16.msra.mxu0 %v776
    %784 = vmatpush.bf16.msra.mxu0 %v775
    %785 = vmatpush.bf16.msra.mxu0 %v774
    %786 = vmatpush.bf16.msra.mxu0 %v773
    %787 = vmatpush.bf16.msra.mxu0 %v772
    %788 = vmatmul.bf16.gmra.mxu0 %v293
    %v789 = vpop.f32.mrf.mxu0
    %v790 = vadd.f32 0.0, %v789
    %v791 = vpop.f32.mrf.mxu0
    %v792 = vadd.f32 0.0, %v791
    %793 = vmatmul.bf16.gmra.mxu0 %v294
    %v794 = vpop.f32.mrf.mxu0
    %v795 = vadd.f32 0.0, %v794
    %v796 = vpop.f32.mrf.mxu0
    %v797 = vadd.f32 0.0, %v796
    %798 = vmatmul.bf16.gmra.mxu0 %v295
    %v799 = vpop.f32.mrf.mxu0
    %v800 = vadd.f32 0.0, %v799
    %v801 = vpop.f32.mrf.mxu0
    %v802 = vadd.f32 0.0, %v801
    %803 = vmatmul.bf16.gmra.mxu0 %v296
    %v804 = vpop.f32.mrf.mxu0
    %v805 = vadd.f32 0.0, %v804
    %v806 = vpop.f32.mrf.mxu0
    %v807 = vadd.f32 0.0, %v806
    %808 = vmatmul.bf16.gmra.mxu0 %v297
    %v809 = vpop.f32.mrf.mxu0
    %v810 = vadd.f32 0.0, %v809
    %v811 = vpop.f32.mrf.mxu0
    %v812 = vadd.f32 0.0, %v811
    %813 = vmatmul.bf16.gmra.mxu0 %v298
    %v814 = vpop.f32.mrf.mxu0
    %v815 = vadd.f32 0.0, %v814
    %v816 = vpop.f32.mrf.mxu0
    %v817 = vadd.f32 0.0, %v816
    %818 = vmatmul.bf16.gmra.mxu0 %v299
    %v819 = vpop.f32.mrf.mxu0
    %v820 = vadd.f32 0.0, %v819
    %v821 = vpop.f32.mrf.mxu0
    %v822 = vadd.f32 0.0, %v821
    %823 = vmatmul.bf16.gmra.mxu0 %v300
    %v824 = vpop.f32.mrf.mxu0
    %v825 = vadd.f32 0.0, %v824
    %v826 = vpop.f32.mrf.mxu0
    %v827 = vadd.f32 0.0, %v826
    %828 = vdwg.mxu0
    %v829 = vmul.f32 %v790, %v409
    %v830 = vmul.f32 %v792, %v414
    %v831 = vmul.f32 %v795, %v419
    %v832 = vmul.f32 %v797, %v424
    %v833 = vmul.f32 %v800, %v429
    %v834 = vmul.f32 %v802, %v434
    %v835 = vmul.f32 %v805, %v439
    %v836 = vmul.f32 %v807, %v444
    %v837 = vmul.f32 %v810, %v449
    %v838 = vmul.f32 %v812, %v454
    %v839 = vmul.f32 %v815, %v459
    %v840 = vmul.f32 %v817, %v464
    %v841 = vmul.f32 %v820, %v469
    %v842 = vmul.f32 %v822, %v474
    %v843 = vmul.f32 %v825, %v479
    %v844 = vmul.f32 %v827, %v484
    %v845 = vpack.c.bf16 %v830, %v829
    %v846 = vpack.c.bf16 %v832, %v831
    %v847 = vpack.c.bf16 %v834, %v833
    %v848 = vpack.c.bf16 %v836, %v835
    %v849 = vpack.c.bf16 %v838, %v837
    %v850 = vpack.c.bf16 %v840, %v839
    %v851 = vpack.c.bf16 %v842, %v841
    %v852 = vpack.c.bf16 %v844, %v843
    %v869 = vunpack.c.l.b16 %v755
    %v870 = vunpack.c.l.b16 %v756
    %v871 = vunpack.c.l.b16 %v757
    %v872 = vunpack.c.l.b16 %v758
    %v873 = vunpack.c.l.b16 %v759
    %v874 = vunpack.c.l.b16 %v760
    %v875 = vunpack.c.l.b16 %v761
    %v876 = vunpack.c.l.b16 %v762
    %v877 = vunpack.c.l.b16 %v763
    %v878 = vunpack.c.l.b16 %v764
    %v879 = vunpack.c.l.b16 %v765
    %v880 = vunpack.c.l.b16 %v766
    %v881 = vunpack.c.l.b16 %v767
    %v882 = vunpack.c.l.b16 %v768
    %v883 = vunpack.c.l.b16 %v769
    %v884 = vunpack.c.l.b16 %v770
    %v885 = vpack.c.b16 %v870, %v869
    %v886 = vpack.c.b16 %v872, %v871
    %v887 = vpack.c.b16 %v874, %v873
    %v888 = vpack.c.b16 %v876, %v875
    %v889 = vpack.c.b16 %v878, %v877
    %v890 = vpack.c.b16 %v880, %v879
    %v891 = vpack.c.b16 %v882, %v881
    %v892 = vpack.c.b16 %v884, %v883
    %901 = vmatpush.bf16.msra.mxu0 %v892
    %902 = vmatpush.bf16.msra.mxu0 %v891
    %903 = vmatpush.bf16.msra.mxu0 %v890
    %904 = vmatpush.bf16.msra.mxu0 %v889
    %905 = vmatpush.bf16.msra.mxu0 %v888
    %906 = vmatpush.bf16.msra.mxu0 %v887
    %907 = vmatpush.bf16.msra.mxu0 %v886
    %908 = vmatpush.bf16.msra.mxu0 %v885
    %909 = vmatmul.bf16.gmra.mxu0 %v772
    %v910 = vpop.f32.mrf.mxu0
    %v911 = vadd.f32 0.0, %v910
    %v912 = vpop.f32.mrf.mxu0
    %v913 = vadd.f32 0.0, %v912
    %914 = vmatmul.bf16.gmra.mxu0 %v773
    %v915 = vpop.f32.mrf.mxu0
    %v916 = vadd.f32 0.0, %v915
    %v917 = vpop.f32.mrf.mxu0
    %v918 = vadd.f32 0.0, %v917
    %919 = vmatmul.bf16.gmra.mxu0 %v774
    %v920 = vpop.f32.mrf.mxu0
    %v921 = vadd.f32 0.0, %v920
    %v922 = vpop.f32.mrf.mxu0
    %v923 = vadd.f32 0.0, %v922
    %924 = vmatmul.bf16.gmra.mxu0 %v775
    %v925 = vpop.f32.mrf.mxu0
    %v926 = vadd.f32 0.0, %v925
    %v927 = vpop.f32.mrf.mxu0
    %v928 = vadd.f32 0.0, %v927
    %929 = vmatmul.bf16.gmra.mxu0 %v776
    %v930 = vpop.f32.mrf.mxu0
    %v931 = vadd.f32 0.0, %v930
    %v932 = vpop.f32.mrf.mxu0
    %v933 = vadd.f32 0.0, %v932
    %934 = vmatmul.bf16.gmra.mxu0 %v777
    %v935 = vpop.f32.mrf.mxu0
    %v936 = vadd.f32 0.0, %v935
    %v937 = vpop.f32.mrf.mxu0
    %v938 = vadd.f32 0.0, %v937
    %939 = vmatmul.bf16.gmra.mxu0 %v778
    %v940 = vpop.f32.mrf.mxu0
    %v941 = vadd.f32 0.0, %v940
    %v942 = vpop.f32.mrf.mxu0
    %v943 = vadd.f32 0.0, %v942
    %944 = vmatmul.bf16.gmra.mxu0 %v779
    %v945 = vpop.f32.mrf.mxu0
    %v946 = vadd.f32 0.0, %v945
    %v947 = vpop.f32.mrf.mxu0
    %v948 = vadd.f32 0.0, %v947
    %949 = vdwg.mxu0
    %v966 = vunpack.c.l.b16 %v739
    %v967 = vunpack.c.l.b16 %v740
    %v968 = vunpack.c.l.b16 %v741
    %v969 = vunpack.c.l.b16 %v742
    %v970 = vunpack.c.l.b16 %v743
    %v971 = vunpack.c.l.b16 %v744
    %v972 = vunpack.c.l.b16 %v745
    %v973 = vunpack.c.l.b16 %v746
    %v974 = vunpack.c.l.b16 %v747
    %v975 = vunpack.c.l.b16 %v748
    %v976 = vunpack.c.l.b16 %v749
    %v977 = vunpack.c.l.b16 %v750
    %v978 = vunpack.c.l.b16 %v751
    %v979 = vunpack.c.l.b16 %v752
    %v980 = vunpack.c.l.b16 %v753
    %v981 = vunpack.c.l.b16 %v754
    %v982 = vpack.c.b16 %v967, %v966
    %v983 = vpack.c.b16 %v969, %v968
    %v984 = vpack.c.b16 %v971, %v970
    %v985 = vpack.c.b16 %v973, %v972
    %v986 = vpack.c.b16 %v975, %v974
    %v987 = vpack.c.b16 %v977, %v976
    %v988 = vpack.c.b16 %v979, %v978
    %v989 = vpack.c.b16 %v981, %v980
    %998 = vmatpush.bf16.msra.mxu0 %v989
    %999 = vmatpush.bf16.msra.mxu0 %v988
    %1000 = vmatpush.bf16.msra.mxu0 %v987
    %1001 = vmatpush.bf16.msra.mxu0 %v986
    %1002 = vmatpush.bf16.msra.mxu0 %v985
    %1003 = vmatpush.bf16.msra.mxu0 %v984
    %1004 = vmatpush.bf16.msra.mxu0 %v983
    %1005 = vmatpush.bf16.msra.mxu0 %v982
    %1006 = vmatmul.bf16.gmra.mxu0 %v845
    %v1007 = vpop.f32.mrf.mxu0
    %v1008 = vadd.f32 %v911, %v1007
    %v1009 = vpop.f32.mrf.mxu0
    %v1010 = vadd.f32 %v913, %v1009
    %1011 = vmatmul.bf16.gmra.mxu0 %v846
    %v1012 = vpop.f32.mrf.mxu0
    %v1013 = vadd.f32 %v916, %v1012
    %v1014 = vpop.f32.mrf.mxu0
    %v1015 = vadd.f32 %v918, %v1014
    %1016 = vmatmul.bf16.gmra.mxu0 %v847
    %v1017 = vpop.f32.mrf.mxu0
    %v1018 = vadd.f32 %v921, %v1017
    %v1019 = vpop.f32.mrf.mxu0
    %v1020 = vadd.f32 %v923, %v1019
    %1021 = vmatmul.bf16.gmra.mxu0 %v848
    %v1022 = vpop.f32.mrf.mxu0
    %v1023 = vadd.f32 %v926, %v1022
    %v1024 = vpop.f32.mrf.mxu0
    %v1025 = vadd.f32 %v928, %v1024
    %1026 = vmatmul.bf16.gmra.mxu0 %v849
    %v1027 = vpop.f32.mrf.mxu0
    %v1028 = vadd.f32 %v931, %v1027
    %v1029 = vpop.f32.mrf.mxu0
    %v1030 = vadd.f32 %v933, %v1029
    %1031 = vmatmul.bf16.gmra.mxu0 %v850
    %v1032 = vpop.f32.mrf.mxu0
    %v1033 = vadd.f32 %v936, %v1032
    %v1034 = vpop.f32.mrf.mxu0
    %v1035 = vadd.f32 %v938, %v1034
    %1036 = vmatmul.bf16.gmra.mxu0 %v851
    %v1037 = vpop.f32.mrf.mxu0
    %v1038 = vadd.f32 %v941, %v1037
    %v1039 = vpop.f32.mrf.mxu0
    %v1040 = vadd.f32 %v943, %v1039
    %1041 = vmatmul.bf16.gmra.mxu0 %v852
    %v1042 = vpop.f32.mrf.mxu0
    %v1043 = vadd.f32 %v946, %v1042
    %v1044 = vpop.f32.mrf.mxu0
    %v1045 = vadd.f32 %v948, %v1044
    %1046 = vdwg.mxu0
    %v1048 = vperm.slane %v771, 0
    %v1050 = vadd.f32 %v1008, %v1048
    %v1051 = vadd.f32 %v1010, %v1048
    %v1052 = vadd.f32 %v1013, %v1048
    %v1053 = vadd.f32 %v1015, %v1048
    %v1054 = vadd.f32 %v1018, %v1048
    %v1055 = vadd.f32 %v1020, %v1048
    %v1056 = vadd.f32 %v1023, %v1048
    %v1057 = vadd.f32 %v1025, %v1048
    %v1058 = vadd.f32 %v1028, %v1048
    %v1059 = vadd.f32 %v1030, %v1048
    %v1060 = vadd.f32 %v1033, %v1048
    %v1061 = vadd.f32 %v1035, %v1048
    %v1062 = vadd.f32 %v1038, %v1048
    %v1063 = vadd.f32 %v1040, %v1048
    %v1064 = vadd.f32 %v1043, %v1048
    %v1065 = vadd.f32 %v1045, %v1048
    %v1066 = vmax.f32 %v1050, 0.0
    %v1067 = vmax.f32 %v1051, 0.0
    %v1068 = vmax.f32 %v1052, 0.0
    %v1069 = vmax.f32 %v1053, 0.0
    %v1070 = vmax.f32 %v1054, 0.0
    %v1071 = vmax.f32 %v1055, 0.0
    %v1072 = vmax.f32 %v1056, 0.0
    %v1073 = vmax.f32 %v1057, 0.0
    %v1074 = vmax.f32 %v1058, 0.0
    %v1075 = vmax.f32 %v1059, 0.0
    %v1076 = vmax.f32 %v1060, 0.0
    %v1077 = vmax.f32 %v1061, 0.0
    %v1078 = vmax.f32 %v1062, 0.0
    %v1079 = vmax.f32 %v1063, 0.0
    %v1080 = vmax.f32 %v1064, 0.0
    %v1081 = vmax.f32 %v1065, 0.0
    %v1082 = vld [vmem:[#allocation14] sm:$0xf]
    %v1083 = vld [vmem:[#allocation14 + $0x4] sm:$0xf]
    %v1084 = vld [vmem:[#allocation14 + $0x8] sm:$0xf]
    %v1085 = vld [vmem:[#allocation14 + $0xc] sm:$0xf]
    %v1086 = vld [vmem:[#allocation14 + $0x10] sm:$0xf]
    %v1087 = vld [vmem:[#allocation14 + $0x14] sm:$0xf]
    %v1088 = vld [vmem:[#allocation14 + $0x18] sm:$0xf]
    %v1089 = vld [vmem:[#allocation14 + $0x1c] sm:$0xf]
    %v1090 = vld [vmem:[#allocation14 + $0x20] sm:$0xf]
    %v1091 = vld [vmem:[#allocation14 + $0x24] sm:$0xf]
    %v1092 = vld [vmem:[#allocation14 + $0x28] sm:$0xf]
    %v1093 = vld [vmem:[#allocation14 + $0x2c] sm:$0xf]
    %v1094 = vld [vmem:[#allocation14 + $0x30] sm:$0xf]
    %v1095 = vld [vmem:[#allocation14 + $0x34] sm:$0xf]
    %v1096 = vld [vmem:[#allocation14 + $0x38] sm:$0xf]
    %v1097 = vld [vmem:[#allocation14 + $0x3c] sm:$0xf]
    %v1098 = vld [vmem:[#allocation15] sm:$0xf]
    %v1099 = vld [vmem:[#allocation15 + $0x4] sm:$0xf]
    %v1100 = vld [vmem:[#allocation15 + $0x8] sm:$0xf]
    %v1101 = vld [vmem:[#allocation15 + $0xc] sm:$0xf]
    %v1102 = vld [vmem:[#allocation15 + $0x10] sm:$0xf]
    %v1103 = vld [vmem:[#allocation15 + $0x14] sm:$0xf]
    %v1104 = vld [vmem:[#allocation15 + $0x18] sm:$0xf]
    %v1105 = vld [vmem:[#allocation15 + $0x1c] sm:$0xf]
    %v1106 = vld [vmem:[#allocation15 + $0x20] sm:$0xf]
    %v1107 = vld [vmem:[#allocation15 + $0x24] sm:$0xf]
    %v1108 = vld [vmem:[#allocation15 + $0x28] sm:$0xf]
    %v1109 = vld [vmem:[#allocation15 + $0x2c] sm:$0xf]
    %v1110 = vld [vmem:[#allocation15 + $0x30] sm:$0xf]
    %v1111 = vld [vmem:[#allocation15 + $0x34] sm:$0xf]
    %v1112 = vld [vmem:[#allocation15 + $0x38] sm:$0xf]
    %v1113 = vld [vmem:[#allocation15 + $0x3c] sm:$0xf]
    %v1114 = vld [vmem:[%s12] sm:$0x1]
    %v1115 = vpack.c.bf16 %v1067, %v1066
    %v1116 = vpack.c.bf16 %v1069, %v1068
    %v1117 = vpack.c.bf16 %v1071, %v1070
    %v1118 = vpack.c.bf16 %v1073, %v1072
    %v1119 = vpack.c.bf16 %v1075, %v1074
    %v1120 = vpack.c.bf16 %v1077, %v1076
    %v1121 = vpack.c.bf16 %v1079, %v1078
    %v1122 = vpack.c.bf16 %v1081, %v1080
    %1123 = vmatpush.bf16.msra.mxu0 %v1122
    %1124 = vmatpush.bf16.msra.mxu0 %v1121
    %1125 = vmatpush.bf16.msra.mxu0 %v1120
    %1126 = vmatpush.bf16.msra.mxu0 %v1119
    %1127 = vmatpush.bf16.msra.mxu0 %v1118
    %1128 = vmatpush.bf16.msra.mxu0 %v1117
    %1129 = vmatpush.bf16.msra.mxu0 %v1116
    %1130 = vmatpush.bf16.msra.mxu0 %v1115
    %1131 = vmatmul.bf16.gmra.mxu0 %v293
    %v1132 = vpop.f32.mrf.mxu0
    %v1133 = vadd.f32 0.0, %v1132
    %v1134 = vpop.f32.mrf.mxu0
    %v1135 = vadd.f32 0.0, %v1134
    %1136 = vmatmul.bf16.gmra.mxu0 %v294
    %v1137 = vpop.f32.mrf.mxu0
    %v1138 = vadd.f32 0.0, %v1137
    %v1139 = vpop.f32.mrf.mxu0
    %v1140 = vadd.f32 0.0, %v1139
    %1141 = vmatmul.bf16.gmra.mxu0 %v295
    %v1142 = vpop.f32.mrf.mxu0
    %v1143 = vadd.f32 0.0, %v1142
    %v1144 = vpop.f32.mrf.mxu0
    %v1145 = vadd.f32 0.0, %v1144
    %1146 = vmatmul.bf16.gmra.mxu0 %v296
    %v1147 = vpop.f32.mrf.mxu0
    %v1148 = vadd.f32 0.0, %v1147
    %v1149 = vpop.f32.mrf.mxu0
    %v1150 = vadd.f32 0.0, %v1149
    %1151 = vmatmul.bf16.gmra.mxu0 %v297
    %v1152 = vpop.f32.mrf.mxu0
    %v1153 = vadd.f32 0.0, %v1152
    %v1154 = vpop.f32.mrf.mxu0
    %v1155 = vadd.f32 0.0, %v1154
    %1156 = vmatmul.bf16.gmra.mxu0 %v298
    %v1157 = vpop.f32.mrf.mxu0
    %v1158 = vadd.f32 0.0, %v1157
    %v1159 = vpop.f32.mrf.mxu0
    %v1160 = vadd.f32 0.0, %v1159
    %1161 = vmatmul.bf16.gmra.mxu0 %v299
    %v1162 = vpop.f32.mrf.mxu0
    %v1163 = vadd.f32 0.0, %v1162
    %v1164 = vpop.f32.mrf.mxu0
    %v1165 = vadd.f32 0.0, %v1164
    %1166 = vmatmul.bf16.gmra.mxu0 %v300
    %v1167 = vpop.f32.mrf.mxu0
    %v1168 = vadd.f32 0.0, %v1167
    %v1169 = vpop.f32.mrf.mxu0
    %v1170 = vadd.f32 0.0, %v1169
    %1171 = vdwg.mxu0
    %v1172 = vmul.f32 %v1133, %v409
    %v1173 = vmul.f32 %v1135, %v414
    %v1174 = vmul.f32 %v1138, %v419
    %v1175 = vmul.f32 %v1140, %v424
    %v1176 = vmul.f32 %v1143, %v429
    %v1177 = vmul.f32 %v1145, %v434
    %v1178 = vmul.f32 %v1148, %v439
    %v1179 = vmul.f32 %v1150, %v444
    %v1180 = vmul.f32 %v1153, %v449
    %v1181 = vmul.f32 %v1155, %v454
    %v1182 = vmul.f32 %v1158, %v459
    %v1183 = vmul.f32 %v1160, %v464
    %v1184 = vmul.f32 %v1163, %v469
    %v1185 = vmul.f32 %v1165, %v474
    %v1186 = vmul.f32 %v1168, %v479
    %v1187 = vmul.f32 %v1170, %v484
    %v1188 = vpack.c.bf16 %v1173, %v1172
    %v1189 = vpack.c.bf16 %v1175, %v1174
    %v1190 = vpack.c.bf16 %v1177, %v1176
    %v1191 = vpack.c.bf16 %v1179, %v1178
    %v1192 = vpack.c.bf16 %v1181, %v1180
    %v1193 = vpack.c.bf16 %v1183, %v1182
    %v1194 = vpack.c.bf16 %v1185, %v1184
    %v1195 = vpack.c.bf16 %v1187, %v1186
    %v1212 = vunpack.c.l.b16 %v1098
    %v1213 = vunpack.c.l.b16 %v1099
    %v1214 = vunpack.c.l.b16 %v1100
    %v1215 = vunpack.c.l.b16 %v1101
    %v1216 = vunpack.c.l.b16 %v1102
    %v1217 = vunpack.c.l.b16 %v1103
    %v1218 = vunpack.c.l.b16 %v1104
    %v1219 = vunpack.c.l.b16 %v1105
    %v1220 = vunpack.c.l.b16 %v1106
    %v1221 = vunpack.c.l.b16 %v1107
    %v1222 = vunpack.c.l.b16 %v1108
    %v1223 = vunpack.c.l.b16 %v1109
    %v1224 = vunpack.c.l.b16 %v1110
    %v1225 = vunpack.c.l.b16 %v1111
    %v1226 = vunpack.c.l.b16 %v1112
    %v1227 = vunpack.c.l.b16 %v1113
    %v1228 = vpack.c.b16 %v1213, %v1212
    %v1229 = vpack.c.b16 %v1215, %v1214
    %v1230 = vpack.c.b16 %v1217, %v1216
    %v1231 = vpack.c.b16 %v1219, %v1218
    %v1232 = vpack.c.b16 %v1221, %v1220
    %v1233 = vpack.c.b16 %v1223, %v1222
    %v1234 = vpack.c.b16 %v1225, %v1224
    %v1235 = vpack.c.b16 %v1227, %v1226
    %1244 = vmatpush.bf16.msra.mxu0 %v1235
    %1245 = vmatpush.bf16.msra.mxu0 %v1234
    %1246 = vmatpush.bf16.msra.mxu0 %v1233
    %1247 = vmatpush.bf16.msra.mxu0 %v1232
    %1248 = vmatpush.bf16.msra.mxu0 %v1231
    %1249 = vmatpush.bf16.msra.mxu0 %v1230
    %1250 = vmatpush.bf16.msra.mxu0 %v1229
    %1251 = vmatpush.bf16.msra.mxu0 %v1228
    %1252 = vmatmul.bf16.gmra.mxu0 %v1115
    %v1253 = vpop.f32.mrf.mxu0
    %v1254 = vadd.f32 0.0, %v1253
    %v1255 = vpop.f32.mrf.mxu0
    %v1256 = vadd.f32 0.0, %v1255
    %1257 = vmatmul.bf16.gmra.mxu0 %v1116
    %v1258 = vpop.f32.mrf.mxu0
    %v1259 = vadd.f32 0.0, %v1258
    %v1260 = vpop.f32.mrf.mxu0
    %v1261 = vadd.f32 0.0, %v1260
    %1262 = vmatmul.bf16.gmra.mxu0 %v1117
    %v1263 = vpop.f32.mrf.mxu0
    %v1264 = vadd.f32 0.0, %v1263
    %v1265 = vpop.f32.mrf.mxu0
    %v1266 = vadd.f32 0.0, %v1265
    %1267 = vmatmul.bf16.gmra.mxu0 %v1118
    %v1268 = vpop.f32.mrf.mxu0
    %v1269 = vadd.f32 0.0, %v1268
    %v1270 = vpop.f32.mrf.mxu0
    %v1271 = vadd.f32 0.0, %v1270
    %1272 = vmatmul.bf16.gmra.mxu0 %v1119
    %v1273 = vpop.f32.mrf.mxu0
    %v1274 = vadd.f32 0.0, %v1273
    %v1275 = vpop.f32.mrf.mxu0
    %v1276 = vadd.f32 0.0, %v1275
    %1277 = vmatmul.bf16.gmra.mxu0 %v1120
    %v1278 = vpop.f32.mrf.mxu0
    %v1279 = vadd.f32 0.0, %v1278
    %v1280 = vpop.f32.mrf.mxu0
    %v1281 = vadd.f32 0.0, %v1280
    %1282 = vmatmul.bf16.gmra.mxu0 %v1121
    %v1283 = vpop.f32.mrf.mxu0
    %v1284 = vadd.f32 0.0, %v1283
    %v1285 = vpop.f32.mrf.mxu0
    %v1286 = vadd.f32 0.0, %v1285
    %1287 = vmatmul.bf16.gmra.mxu0 %v1122
    %v1288 = vpop.f32.mrf.mxu0
    %v1289 = vadd.f32 0.0, %v1288
    %v1290 = vpop.f32.mrf.mxu0
    %v1291 = vadd.f32 0.0, %v1290
    %1292 = vdwg.mxu0
    %v1309 = vunpack.c.l.b16 %v1082
    %v1310 = vunpack.c.l.b16 %v1083
    %v1311 = vunpack.c.l.b16 %v1084
    %v1312 = vunpack.c.l.b16 %v1085
    %v1313 = vunpack.c.l.b16 %v1086
    %v1314 = vunpack.c.l.b16 %v1087
    %v1315 = vunpack.c.l.b16 %v1088
    %v1316 = vunpack.c.l.b16 %v1089
    %v1317 = vunpack.c.l.b16 %v1090
    %v1318 = vunpack.c.l.b16 %v1091
    %v1319 = vunpack.c.l.b16 %v1092
    %v1320 = vunpack.c.l.b16 %v1093
    %v1321 = vunpack.c.l.b16 %v1094
    %v1322 = vunpack.c.l.b16 %v1095
    %v1323 = vunpack.c.l.b16 %v1096
    %v1324 = vunpack.c.l.b16 %v1097
    %v1325 = vpack.c.b16 %v1310, %v1309
    %v1326 = vpack.c.b16 %v1312, %v1311
    %v1327 = vpack.c.b16 %v1314, %v1313
    %v1328 = vpack.c.b16 %v1316, %v1315
    %v1329 = vpack.c.b16 %v1318, %v1317
    %v1330 = vpack.c.b16 %v1320, %v1319
    %v1331 = vpack.c.b16 %v1322, %v1321
    %v1332 = vpack.c.b16 %v1324, %v1323
    %1341 = vmatpush.bf16.msra.mxu0 %v1332
    %1342 = vmatpush.bf16.msra.mxu0 %v1331
    %1343 = vmatpush.bf16.msra.mxu0 %v1330
    %1344 = vmatpush.bf16.msra.mxu0 %v1329
    %1345 = vmatpush.bf16.msra.mxu0 %v1328
    %1346 = vmatpush.bf16.msra.mxu0 %v1327
    %1347 = vmatpush.bf16.msra.mxu0 %v1326
    %1348 = vmatpush.bf16.msra.mxu0 %v1325
    %1349 = vmatmul.bf16.gmra.mxu0 %v1188
    %v1350 = vpop.f32.mrf.mxu0
    %v1351 = vadd.f32 %v1254, %v1350
    %v1352 = vpop.f32.mrf.mxu0
    %v1353 = vadd.f32 %v1256, %v1352
    %1354 = vmatmul.bf16.gmra.mxu0 %v1189
    %v1355 = vpop.f32.mrf.mxu0
    %v1356 = vadd.f32 %v1259, %v1355
    %v1357 = vpop.f32.mrf.mxu0
    %v1358 = vadd.f32 %v1261, %v1357
    %1359 = vmatmul.bf16.gmra.mxu0 %v1190
    %v1360 = vpop.f32.mrf.mxu0
    %v1361 = vadd.f32 %v1264, %v1360
    %v1362 = vpop.f32.mrf.mxu0
    %v1363 = vadd.f32 %v1266, %v1362
    %1364 = vmatmul.bf16.gmra.mxu0 %v1191
    %v1365 = vpop.f32.mrf.mxu0
    %v1366 = vadd.f32 %v1269, %v1365
    %v1367 = vpop.f32.mrf.mxu0
    %v1368 = vadd.f32 %v1271, %v1367
    %1369 = vmatmul.bf16.gmra.mxu0 %v1192
    %v1370 = vpop.f32.mrf.mxu0
    %v1371 = vadd.f32 %v1274, %v1370
    %v1372 = vpop.f32.mrf.mxu0
    %v1373 = vadd.f32 %v1276, %v1372
    %1374 = vmatmul.bf16.gmra.mxu0 %v1193
    %v1375 = vpop.f32.mrf.mxu0
    %v1376 = vadd.f32 %v1279, %v1375
    %v1377 = vpop.f32.mrf.mxu0
    %v1378 = vadd.f32 %v1281, %v1377
    %1379 = vmatmul.bf16.gmra.mxu0 %v1194
    %v1380 = vpop.f32.mrf.mxu0
    %v1381 = vadd.f32 %v1284, %v1380
    %v1382 = vpop.f32.mrf.mxu0
    %v1383 = vadd.f32 %v1286, %v1382
    %1384 = vmatmul.bf16.gmra.mxu0 %v1195
    %v1385 = vpop.f32.mrf.mxu0
    %v1386 = vadd.f32 %v1289, %v1385
    %v1387 = vpop.f32.mrf.mxu0
    %v1388 = vadd.f32 %v1291, %v1387
    %1389 = vdwg.mxu0
    %v1391 = vperm.slane %v1114, 0
    %v1393 = vadd.f32 %v1351, %v1391
    %v1394 = vadd.f32 %v1353, %v1391
    %v1395 = vadd.f32 %v1356, %v1391
    %v1396 = vadd.f32 %v1358, %v1391
    %v1397 = vadd.f32 %v1361, %v1391
    %v1398 = vadd.f32 %v1363, %v1391
    %v1399 = vadd.f32 %v1366, %v1391
    %v1400 = vadd.f32 %v1368, %v1391
    %v1401 = vadd.f32 %v1371, %v1391
    %v1402 = vadd.f32 %v1373, %v1391
    %v1403 = vadd.f32 %v1376, %v1391
    %v1404 = vadd.f32 %v1378, %v1391
    %v1405 = vadd.f32 %v1381, %v1391
    %v1406 = vadd.f32 %v1383, %v1391
    %v1407 = vadd.f32 %v1386, %v1391
    %v1408 = vadd.f32 %v1388, %v1391
    %1409 = vst [vmem:[#allocation2] sm:$0xff] 0.0
    %v1410 = vlaneseq
    %v1411 = vshrl.u32 %v1410, 7
    %v1412 = vadd.s32 %v1411, 8
    %v1413 = vadd.s32 %v1411, 16
    %v1414 = vadd.s32 %v1411, 24
    %v1415 = vadd.s32 %v1411, 32
    %v1416 = vadd.s32 %v1411, 40
    %v1417 = vadd.s32 %v1411, 48
    %v1418 = vadd.s32 %v1411, 56
    %v1419 = vadd.s32 %v1411, 64
    %v1420 = vadd.s32 %v1411, 72
    %v1421 = vadd.s32 %v1411, 80
    %v1422 = vadd.s32 %v1411, 88
    %v1423 = vadd.s32 %v1411, 96
    %v1424 = vadd.s32 %v1411, 104
    %v1425 = vadd.s32 %v1411, 112
    %v1426 = vadd.s32 %v1411, 120
    %s1427 = sld [smem:[#allocation4]]
    %v1428 = vstv %s1427
    %vm1429 = vcmp.eq.s32.totalorder %v1411, %v1428
    %vm1430 = vcmp.eq.s32.totalorder %v1412, %v1428
    %vm1431 = vcmp.eq.s32.totalorder %v1413, %v1428
    %vm1432 = vcmp.eq.s32.totalorder %v1414, %v1428
    %vm1433 = vcmp.eq.s32.totalorder %v1415, %v1428
    %vm1434 = vcmp.eq.s32.totalorder %v1416, %v1428
    %vm1435 = vcmp.eq.s32.totalorder %v1417, %v1428
    %vm1436 = vcmp.eq.s32.totalorder %v1418, %v1428
    %vm1437 = vcmp.eq.s32.totalorder %v1419, %v1428
    %vm1438 = vcmp.eq.s32.totalorder %v1420, %v1428
    %vm1439 = vcmp.eq.s32.totalorder %v1421, %v1428
    %vm1440 = vcmp.eq.s32.totalorder %v1422, %v1428
    %vm1441 = vcmp.eq.s32.totalorder %v1423, %v1428
    %vm1442 = vcmp.eq.s32.totalorder %v1424, %v1428
    %vm1443 = vcmp.eq.s32.totalorder %v1425, %v1428
    %vm1444 = vcmp.eq.s32.totalorder %v1426, %v1428
    %v1445 = vsel %vm1429, 1, 0
    %v1446 = vsel %vm1430, 1, 0
    %v1447 = vsel %vm1431, 1, 0
    %v1448 = vsel %vm1432, 1, 0
    %v1449 = vsel %vm1433, 1, 0
    %v1450 = vsel %vm1434, 1, 0
    %v1451 = vsel %vm1435, 1, 0
    %v1452 = vsel %vm1436, 1, 0
    %v1453 = vsel %vm1437, 1, 0
    %v1454 = vsel %vm1438, 1, 0
    %v1455 = vsel %vm1439, 1, 0
    %v1456 = vsel %vm1440, 1, 0
    %v1457 = vsel %vm1441, 1, 0
    %v1458 = vsel %vm1442, 1, 0
    %v1459 = vsel %vm1443, 1, 0
    %v1460 = vsel %vm1444, 1, 0
    %v1461 = vcvt.s32.f32 %v1445
    %v1462 = vcvt.s32.f32 %v1446
    %v1463 = vcvt.s32.f32 %v1447
    %v1464 = vcvt.s32.f32 %v1448
    %v1465 = vcvt.s32.f32 %v1449
    %v1466 = vcvt.s32.f32 %v1450
    %v1467 = vcvt.s32.f32 %v1451
    %v1468 = vcvt.s32.f32 %v1452
    %v1469 = vcvt.s32.f32 %v1453
    %v1470 = vcvt.s32.f32 %v1454
    %v1471 = vcvt.s32.f32 %v1455
    %v1472 = vcvt.s32.f32 %v1456
    %v1473 = vcvt.s32.f32 %v1457
    %v1474 = vcvt.s32.f32 %v1458
    %v1475 = vcvt.s32.f32 %v1459
    %v1476 = vcvt.s32.f32 %v1460
    %s1477 = sadd.s32 %s1427, 1
    %v1478 = vstv %s1477
    %vm1479 = vcmp.eq.s32.totalorder %v1411, %v1478
    %vm1480 = vcmp.eq.s32.totalorder %v1412, %v1478
    %vm1481 = vcmp.eq.s32.totalorder %v1413, %v1478
    %vm1482 = vcmp.eq.s32.totalorder %v1414, %v1478
    %vm1483 = vcmp.eq.s32.totalorder %v1415, %v1478
    %vm1484 = vcmp.eq.s32.totalorder %v1416, %v1478
    %vm1485 = vcmp.eq.s32.totalorder %v1417, %v1478
    %vm1486 = vcmp.eq.s32.totalorder %v1418, %v1478
    %vm1487 = vcmp.eq.s32.totalorder %v1419, %v1478
    %vm1488 = vcmp.eq.s32.totalorder %v1420, %v1478
    %vm1489 = vcmp.eq.s32.totalorder %v1421, %v1478
    %vm1490 = vcmp.eq.s32.totalorder %v1422, %v1478
    %vm1491 = vcmp.eq.s32.totalorder %v1423, %v1478
    %vm1492 = vcmp.eq.s32.totalorder %v1424, %v1478
    %vm1493 = vcmp.eq.s32.totalorder %v1425, %v1478
    %vm1494 = vcmp.eq.s32.totalorder %v1426, %v1478
    %v1495 = vsel %vm1479, 1, 0
    %v1496 = vsel %vm1480, 1, 0
    %v1497 = vsel %vm1481, 1, 0
    %v1498 = vsel %vm1482, 1, 0
    %v1499 = vsel %vm1483, 1, 0
    %v1500 = vsel %vm1484, 1, 0
    %v1501 = vsel %vm1485, 1, 0
    %v1502 = vsel %vm1486, 1, 0
    %v1503 = vsel %vm1487, 1, 0
    %v1504 = vsel %vm1488, 1, 0
    %v1505 = vsel %vm1489, 1, 0
    %v1506 = vsel %vm1490, 1, 0
    %v1507 = vsel %vm1491, 1, 0
    %v1508 = vsel %vm1492, 1, 0
    %v1509 = vsel %vm1493, 1, 0
    %v1510 = vsel %vm1494, 1, 0
    %v1511 = vcvt.s32.f32 %v1495
    %v1512 = vcvt.s32.f32 %v1496
    %v1513 = vcvt.s32.f32 %v1497
    %v1514 = vcvt.s32.f32 %v1498
    %v1515 = vcvt.s32.f32 %v1499
    %v1516 = vcvt.s32.f32 %v1500
    %v1517 = vcvt.s32.f32 %v1501
    %v1518 = vcvt.s32.f32 %v1502
    %v1519 = vcvt.s32.f32 %v1503
    %v1520 = vcvt.s32.f32 %v1504
    %v1521 = vcvt.s32.f32 %v1505
    %v1522 = vcvt.s32.f32 %v1506
    %v1523 = vcvt.s32.f32 %v1507
    %v1524 = vcvt.s32.f32 %v1508
    %v1525 = vcvt.s32.f32 %v1509
    %v1526 = vcvt.s32.f32 %v1510
    %v1527 = vmul.f32 %v1393, %v1461
    %v1528 = vmul.f32 %v1394, %v1462
    %v1529 = vmul.f32 %v1395, %v1463
    %v1530 = vmul.f32 %v1396, %v1464
    %v1531 = vmul.f32 %v1397, %v1465
    %v1532 = vmul.f32 %v1398, %v1466
    %v1533 = vmul.f32 %v1399, %v1467
    %v1534 = vmul.f32 %v1400, %v1468
    %v1535 = vmul.f32 %v1401, %v1469
    %v1536 = vmul.f32 %v1402, %v1470
    %v1537 = vmul.f32 %v1403, %v1471
    %v1538 = vmul.f32 %v1404, %v1472
    %v1539 = vmul.f32 %v1405, %v1473
    %v1540 = vmul.f32 %v1406, %v1474
    %v1541 = vmul.f32 %v1407, %v1475
    %v1542 = vmul.f32 %v1408, %v1476
    %v1543 = vadd.f32 %v1527, %v1528
    %v1544 = vadd.f32 %v1543, %v1529
    %v1545 = vadd.f32 %v1544, %v1530
    %v1546 = vadd.f32 %v1545, %v1531
    %v1547 = vadd.f32 %v1546, %v1532
    %v1548 = vadd.f32 %v1547, %v1533
    %v1549 = vadd.f32 %v1548, %v1534
    %v1550 = vadd.f32 %v1549, %v1535
    %v1551 = vadd.f32 %v1550, %v1536
    %v1552 = vadd.f32 %v1551, %v1537
    %v1553 = vadd.f32 %v1552, %v1538
    %v1554 = vadd.f32 %v1553, %v1539
    %v1555 = vadd.f32 %v1554, %v1540
    %v1556 = vadd.f32 %v1555, %v1541
    %v1557 = vadd.f32 %v1556, %v1542
    %v1558 = vrot.slane %v1557, 4
    %v1559 = vadd.f32 %v1557, %v1558
    %v1560 = vrot.slane %v1559, 2
    %v1561 = vadd.f32 %v1559, %v1560
    %v1562 = vrot.slane %v1561, 1
    %v1563 = vadd.f32 %v1561, %v1562
    %v1564 = vmul.f32 %v1393, %v1511
    %v1565 = vmul.f32 %v1394, %v1512
    %v1566 = vmul.f32 %v1395, %v1513
    %v1567 = vmul.f32 %v1396, %v1514
    %v1568 = vmul.f32 %v1397, %v1515
    %v1569 = vmul.f32 %v1398, %v1516
    %v1570 = vmul.f32 %v1399, %v1517
    %v1571 = vmul.f32 %v1400, %v1518
    %v1572 = vmul.f32 %v1401, %v1519
    %v1573 = vmul.f32 %v1402, %v1520
    %v1574 = vmul.f32 %v1403, %v1521
    %v1575 = vmul.f32 %v1404, %v1522
    %v1576 = vmul.f32 %v1405, %v1523
    %v1577 = vmul.f32 %v1406, %v1524
    %v1578 = vmul.f32 %v1407, %v1525
    %v1579 = vmul.f32 %v1408, %v1526
    %v1580 = vadd.f32 %v1564, %v1565
    %v1581 = vadd.f32 %v1580, %v1566
    %v1582 = vadd.f32 %v1581, %v1567
    %v1583 = vadd.f32 %v1582, %v1568
    %v1584 = vadd.f32 %v1583, %v1569
    %v1585 = vadd.f32 %v1584, %v1570
    %v1586 = vadd.f32 %v1585, %v1571
    %v1587 = vadd.f32 %v1586, %v1572
    %v1588 = vadd.f32 %v1587, %v1573
    %v1589 = vadd.f32 %v1588, %v1574
    %v1590 = vadd.f32 %v1589, %v1575
    %v1591 = vadd.f32 %v1590, %v1576
    %v1592 = vadd.f32 %v1591, %v1577
    %v1593 = vadd.f32 %v1592, %v1578
    %v1594 = vadd.f32 %v1593, %v1579
    %v1595 = vrot.slane %v1594, 4
    %v1596 = vadd.f32 %v1594, %v1595
    %v1597 = vrot.slane %v1596, 2
    %v1598 = vadd.f32 %v1596, %v1597
    %v1599 = vrot.slane %v1598, 1
    %v1600 = vadd.f32 %v1598, %v1599
    %v1601 = vmul.f32 %v1563, %v1600
    %1602 = vst [vmem:[#allocation2] sm:$0x1] %v1601
    %s1603 = sld [smem:[#allocation4 + $0x1]]
    %v1604 = vstv %s1603
    %vm1605 = vcmp.eq.s32.totalorder %v1411, %v1604
    %vm1606 = vcmp.eq.s32.totalorder %v1412, %v1604
    %vm1607 = vcmp.eq.s32.totalorder %v1413, %v1604
    %vm1608 = vcmp.eq.s32.totalorder %v1414, %v1604
    %vm1609 = vcmp.eq.s32.totalorder %v1415, %v1604
    %vm1610 = vcmp.eq.s32.totalorder %v1416, %v1604
    %vm1611 = vcmp.eq.s32.totalorder %v1417, %v1604
    %vm1612 = vcmp.eq.s32.totalorder %v1418, %v1604
    %vm1613 = vcmp.eq.s32.totalorder %v1419, %v1604
    %vm1614 = vcmp.eq.s32.totalorder %v1420, %v1604
    %vm1615 = vcmp.eq.s32.totalorder %v1421, %v1604
    %vm1616 = vcmp.eq.s32.totalorder %v1422, %v1604
    %vm1617 = vcmp.eq.s32.totalorder %v1423, %v1604
    %vm1618 = vcmp.eq.s32.totalorder %v1424, %v1604
    %vm1619 = vcmp.eq.s32.totalorder %v1425, %v1604
    %vm1620 = vcmp.eq.s32.totalorder %v1426, %v1604
    %v1621 = vsel %vm1605, 1, 0
    %v1622 = vsel %vm1606, 1, 0
    %v1623 = vsel %vm1607, 1, 0
    %v1624 = vsel %vm1608, 1, 0
    %v1625 = vsel %vm1609, 1, 0
    %v1626 = vsel %vm1610, 1, 0
    %v1627 = vsel %vm1611, 1, 0
    %v1628 = vsel %vm1612, 1, 0
    %v1629 = vsel %vm1613, 1, 0
    %v1630 = vsel %vm1614, 1, 0
    %v1631 = vsel %vm1615, 1, 0
    %v1632 = vsel %vm1616, 1, 0
    %v1633 = vsel %vm1617, 1, 0
    %v1634 = vsel %vm1618, 1, 0
    %v1635 = vsel %vm1619, 1, 0
    %v1636 = vsel %vm1620, 1, 0
    %v1637 = vcvt.s32.f32 %v1621
    %v1638 = vcvt.s32.f32 %v1622
    %v1639 = vcvt.s32.f32 %v1623
    %v1640 = vcvt.s32.f32 %v1624
    %v1641 = vcvt.s32.f32 %v1625
    %v1642 = vcvt.s32.f32 %v1626
    %v1643 = vcvt.s32.f32 %v1627
    %v1644 = vcvt.s32.f32 %v1628
    %v1645 = vcvt.s32.f32 %v1629
    %v1646 = vcvt.s32.f32 %v1630
    %v1647 = vcvt.s32.f32 %v1631
    %v1648 = vcvt.s32.f32 %v1632
    %v1649 = vcvt.s32.f32 %v1633
    %v1650 = vcvt.s32.f32 %v1634
    %v1651 = vcvt.s32.f32 %v1635
    %v1652 = vcvt.s32.f32 %v1636
    %s1653 = sadd.s32 %s1603, 1
    %v1654 = vstv %s1653
    %vm1655 = vcmp.eq.s32.totalorder %v1411, %v1654
    %vm1656 = vcmp.eq.s32.totalorder %v1412, %v1654
    %vm1657 = vcmp.eq.s32.totalorder %v1413, %v1654
    %vm1658 = vcmp.eq.s32.totalorder %v1414, %v1654
    %vm1659 = vcmp.eq.s32.totalorder %v1415, %v1654
    %vm1660 = vcmp.eq.s32.totalorder %v1416, %v1654
    %vm1661 = vcmp.eq.s32.totalorder %v1417, %v1654
    %vm1662 = vcmp.eq.s32.totalorder %v1418, %v1654
    %vm1663 = vcmp.eq.s32.totalorder %v1419, %v1654
    %vm1664 = vcmp.eq.s32.totalorder %v1420, %v1654
    %vm1665 = vcmp.eq.s32.totalorder %v1421, %v1654
    %vm1666 = vcmp.eq.s32.totalorder %v1422, %v1654
    %vm1667 = vcmp.eq.s32.totalorder %v1423, %v1654
    %vm1668 = vcmp.eq.s32.totalorder %v1424, %v1654
    %vm1669 = vcmp.eq.s32.totalorder %v1425, %v1654
    %vm1670 = vcmp.eq.s32.totalorder %v1426, %v1654
    %v1671 = vsel %vm1655, 1, 0
    %v1672 = vsel %vm1656, 1, 0
    %v1673 = vsel %vm1657, 1, 0
    %v1674 = vsel %vm1658, 1, 0
    %v1675 = vsel %vm1659, 1, 0
    %v1676 = vsel %vm1660, 1, 0
    %v1677 = vsel %vm1661, 1, 0
    %v1678 = vsel %vm1662, 1, 0
    %v1679 = vsel %vm1663, 1, 0
    %v1680 = vsel %vm1664, 1, 0
    %v1681 = vsel %vm1665, 1, 0
    %v1682 = vsel %vm1666, 1, 0
    %v1683 = vsel %vm1667, 1, 0
    %v1684 = vsel %vm1668, 1, 0
    %v1685 = vsel %vm1669, 1, 0
    %v1686 = vsel %vm1670, 1, 0
    %v1687 = vcvt.s32.f32 %v1671
    %v1688 = vcvt.s32.f32 %v1672
    %v1689 = vcvt.s32.f32 %v1673
    %v1690 = vcvt.s32.f32 %v1674
    %v1691 = vcvt.s32.f32 %v1675
    %v1692 = vcvt.s32.f32 %v1676
    %v1693 = vcvt.s32.f32 %v1677
    %v1694 = vcvt.s32.f32 %v1678
    %v1695 = vcvt.s32.f32 %v1679
    %v1696 = vcvt.s32.f32 %v1680
    %v1697 = vcvt.s32.f32 %v1681
    %v1698 = vcvt.s32.f32 %v1682
    %v1699 = vcvt.s32.f32 %v1683
    %v1700 = vcvt.s32.f32 %v1684
    %v1701 = vcvt.s32.f32 %v1685
    %v1702 = vcvt.s32.f32 %v1686
    %v1703 = vmul.f32 %v1393, %v1637
    %v1704 = vmul.f32 %v1394, %v1638
    %v1705 = vmul.f32 %v1395, %v1639
    %v1706 = vmul.f32 %v1396, %v1640
    %v1707 = vmul.f32 %v1397, %v1641
    %v1708 = vmul.f32 %v1398, %v1642
    %v1709 = vmul.f32 %v1399, %v1643
    %v1710 = vmul.f32 %v1400, %v1644
    %v1711 = vmul.f32 %v1401, %v1645
    %v1712 = vmul.f32 %v1402, %v1646
    %v1713 = vmul.f32 %v1403, %v1647
    %v1714 = vmul.f32 %v1404, %v1648
    %v1715 = vmul.f32 %v1405, %v1649
    %v1716 = vmul.f32 %v1406, %v1650
    %v1717 = vmul.f32 %v1407, %v1651
    %v1718 = vmul.f32 %v1408, %v1652
    %v1719 = vadd.f32 %v1703, %v1704
    %v1720 = vadd.f32 %v1719, %v1705
    %v1721 = vadd.f32 %v1720, %v1706
    %v1722 = vadd.f32 %v1721, %v1707
    %v1723 = vadd.f32 %v1722, %v1708
    %v1724 = vadd.f32 %v1723, %v1709
    %v1725 = vadd.f32 %v1724, %v1710
    %v1726 = vadd.f32 %v1725, %v1711
    %v1727 = vadd.f32 %v1726, %v1712
    %v1728 = vadd.f32 %v1727, %v1713
    %v1729 = vadd.f32 %v1728, %v1714
    %v1730 = vadd.f32 %v1729, %v1715
    %v1731 = vadd.f32 %v1730, %v1716
    %v1732 = vadd.f32 %v1731, %v1717
    %v1733 = vadd.f32 %v1732, %v1718
    %v1734 = vrot.slane %v1733, 4
    %v1735 = vadd.f32 %v1733, %v1734
    %v1736 = vrot.slane %v1735, 2
    %v1737 = vadd.f32 %v1735, %v1736
    %v1738 = vrot.slane %v1737, 1
    %v1739 = vadd.f32 %v1737, %v1738
    %v1740 = vmul.f32 %v1393, %v1687
    %v1741 = vmul.f32 %v1394, %v1688
    %v1742 = vmul.f32 %v1395, %v1689
    %v1743 = vmul.f32 %v1396, %v1690
    %v1744 = vmul.f32 %v1397, %v1691
    %v1745 = vmul.f32 %v1398, %v1692
    %v1746 = vmul.f32 %v1399, %v1693
    %v1747 = vmul.f32 %v1400, %v1694
    %v1748 = vmul.f32 %v1401, %v1695
    %v1749 = vmul.f32 %v1402, %v1696
    %v1750 = vmul.f32 %v1403, %v1697
    %v1751 = vmul.f32 %v1404, %v1698
    %v1752 = vmul.f32 %v1405, %v1699
    %v1753 = vmul.f32 %v1406, %v1700
    %v1754 = vmul.f32 %v1407, %v1701
    %v1755 = vmul.f32 %v1408, %v1702
    %v1756 = vadd.f32 %v1740, %v1741
    %v1757 = vadd.f32 %v1756, %v1742
    %v1758 = vadd.f32 %v1757, %v1743
    %v1759 = vadd.f32 %v1758, %v1744
    %v1760 = vadd.f32 %v1759, %v1745
    %v1761 = vadd.f32 %v1760, %v1746
    %v1762 = vadd.f32 %v1761, %v1747
    %v1763 = vadd.f32 %v1762, %v1748
    %v1764 = vadd.f32 %v1763, %v1749
    %v1765 = vadd.f32 %v1764, %v1750
    %v1766 = vadd.f32 %v1765, %v1751
    %v1767 = vadd.f32 %v1766, %v1752
    %v1768 = vadd.f32 %v1767, %v1753
    %v1769 = vadd.f32 %v1768, %v1754
    %v1770 = vadd.f32 %v1769, %v1755
    %v1771 = vrot.slane %v1770, 4
    %v1772 = vadd.f32 %v1770, %v1771
    %v1773 = vrot.slane %v1772, 2
    %v1774 = vadd.f32 %v1772, %v1773
    %v1775 = vrot.slane %v1774, 1
    %v1776 = vadd.f32 %v1774, %v1775
    %v1777 = vmul.f32 %v1739, %v1776
    %1778 = vst [vmem:[#allocation2 + $0x1] sm:$0x1] %v1777
    %v1779 = vld [vmem:[#allocation2] sm:$0xff]
    %v1780 = vpack.c.bf16 %v1779, %v1779
    %v1781 = vld [vmem:[#allocation17] sm:$0xf]
    %v1782 = vld [vmem:[#allocation17 + $0x4] sm:$0xf]
    %v1783 = vld [vmem:[#allocation17 + $0x8] sm:$0xf]
    %v1784 = vld [vmem:[#allocation17 + $0xc] sm:$0xf]
    %v1785 = vld [vmem:[#allocation17 + $0x10] sm:$0xf]
    %v1786 = vld [vmem:[#allocation17 + $0x14] sm:$0xf]
    %v1787 = vld [vmem:[#allocation17 + $0x18] sm:$0xf]
    %v1788 = vld [vmem:[#allocation17 + $0x1c] sm:$0xf]
    %v1789 = vld [vmem:[#allocation17 + $0x20] sm:$0xf]
    %v1790 = vld [vmem:[#allocation17 + $0x24] sm:$0xf]
    %v1791 = vld [vmem:[#allocation17 + $0x28] sm:$0xf]
    %v1792 = vld [vmem:[#allocation17 + $0x2c] sm:$0xf]
    %v1793 = vld [vmem:[#allocation17 + $0x30] sm:$0xf]
    %v1794 = vld [vmem:[#allocation17 + $0x34] sm:$0xf]
    %v1795 = vld [vmem:[#allocation17 + $0x38] sm:$0xf]
    %v1796 = vld [vmem:[#allocation17 + $0x3c] sm:$0xf]
    %v1797 = vld [vmem:[%s14] sm:$0x1]
    %v1799 = vperm.slane %v1797, 0
    %v1817 = vunpack.c.l.b16 %v1781
    %v1818 = vunpack.c.l.b16 %v1782
    %v1819 = vunpack.c.l.b16 %v1783
    %v1820 = vunpack.c.l.b16 %v1784
    %v1821 = vunpack.c.l.b16 %v1785
    %v1822 = vunpack.c.l.b16 %v1786
    %v1823 = vunpack.c.l.b16 %v1787
    %v1824 = vunpack.c.l.b16 %v1788
    %v1825 = vunpack.c.l.b16 %v1789
    %v1826 = vunpack.c.l.b16 %v1790
    %v1827 = vunpack.c.l.b16 %v1791
    %v1828 = vunpack.c.l.b16 %v1792
    %v1829 = vunpack.c.l.b16 %v1793
    %v1830 = vunpack.c.l.b16 %v1794
    %v1831 = vunpack.c.l.b16 %v1795
    %v1832 = vunpack.c.l.b16 %v1796
    %v1833 = vpack.c.b16 %v1818, %v1817
    %v1834 = vpack.c.b16 %v1820, %v1819
    %v1835 = vpack.c.b16 %v1822, %v1821
    %v1836 = vpack.c.b16 %v1824, %v1823
    %v1837 = vpack.c.b16 %v1826, %v1825
    %v1838 = vpack.c.b16 %v1828, %v1827
    %v1839 = vpack.c.b16 %v1830, %v1829
    %v1840 = vpack.c.b16 %v1832, %v1831
    %1849 = vmatpush.bf16.msra.mxu0 %v1840
    %1850 = vmatpush.bf16.msra.mxu0 %v1839
    %1851 = vmatpush.bf16.msra.mxu0 %v1838
    %1852 = vmatpush.bf16.msra.mxu0 %v1837
    %1853 = vmatpush.bf16.msra.mxu0 %v1836
    %1854 = vmatpush.bf16.msra.mxu0 %v1835
    %1855 = vmatpush.bf16.msra.mxu0 %v1834
    %1856 = vmatpush.bf16.msra.mxu0 %v1833
    %1857 = vmatmul.bf16.gmra.mxu0 %v1780
    %v1858 = vpop.f32.mrf.mxu0
    %v1859 = vadd.f32 %v1799, %v1858
    %v1860 = vpop.f32.mrf.mxu0
    %1861 = vdwg.mxu0
    %v1862 = vmax.f32 %v1859, 0.0
    %v1863 = vld [vmem:[%s15] sm:$0x1]
    %v1865 = vperm.slane %v1863, 0
    %v1867 = vmul.f32 %v1862, %v1865
    %1868 = vadd.xlane.f32.xlu0 %v1867
    %v1869 = vpop.xlane.xlu0 %1868
    %s1870 = sld [smem:[#allocation3]]
    %v1871 = vstv %s1870
    %v1872 = vadd.f32 %v1869, %v1871
    %1873 = vst [vmem:[#allocation18] sm:$0xff] %v1872
    // Predicated region
    $region102: #{tpu_custom_call.1} parent=1 // pred_check
      _
    $region103: #{tpu_custom_call.1} parent=1 // pred_check_branch
      %1875 = sbr.rel (0) target = $region105
    $region104: #{tpu_custom_call.1} parent=1 // pred_region
      %1877 = vsyncadd [#allocation6], 0
      %s1879 = sshll.u32 [#allocation18], 4
      %s1880 = int_to_ptr.vmem [resolvable:$true] %s1879
      %s1881 = sshll.u32 %s17, 4
      %s1882 = int_to_ptr.hbm [resolvable:$true] %s1881
      %1884 = dma.vmem_to_hbm [thread:$0]  %s1880, 128, %s1882, [#allocation6]
    $region105: #{tpu_custom_call.1} parent=1 // pred_fallthru
      _
    // Predicated region
    $region106: #{tpu_custom_call.1} parent=1 // pred_check
      _
    $region107: #{tpu_custom_call.1} parent=1 // pred_check_branch
      %1886 = sbr.rel (0) target = $region109
    $region108: #{tpu_custom_call.1} parent=1 // pred_region
      %1888 = dma.done [#allocation6], 128
    $region109: #{tpu_custom_call.1} parent=1 // pred_fallthru
      _
    %1889 = vsyncpa [#allocation5], 1
    %1890 = vsyncpa [#allocation10], 1
    %1891 = vsyncpa [#allocation13], 1
    %1892 = vsyncpa [#allocation16], 1
    %1893 = vsyncpa [#allocation6], 1
    %1894 = vsyncpa [#allocation7], 1

</llo_original>
